<compile_context>
chip_gen: v7x
topology: tpu7x:2x2x1
jax: 0.10.0
libtpu: 0.0.40
codegen_flags: <defaults>
</compile_context>

<pallas_src>
import functools
import numpy as np
import jax
import jax.numpy as jnp
from jax.experimental import pallas as pl
from jax.experimental.pallas import tpu as pltpu


def transformer_kernel(
    idx_ref,                         # SMEM scalar prefetch: (1,) int32 -> `index`
    x_ref,                           # (TB, S, D)    TB batch rows per grid step
    wq_ref, wk_ref, wv_ref,          # (D, H*dq), (D, H*dk), (D, H*dv)
    headsum_ref,                     # (H*dq, H)  per-head column sum, 1/sqrt(d_k) folded in
    expand_ref,                      # (H, H*dv)  per-head 0/1 expansion matrix
    fcw_ref, fcb_ref,                # (H*dv, D), (1, D)
    ln1g_ref, ln1b_ref,              # (1, D), (1, D)
    win_ref, bin_ref,                # (D, inner), (1, inner)
    wout_ref, bout_ref,              # (inner, D), (1, D)
    ln2g_ref, ln2b_ref,              # (1, D), (1, D)
    o_ref,                           # (TB, D)  lane-dense output
    *, eps=1e-5, compute_dtype=jnp.float32,
):
    idx = idx_ref[0]
    TB, S, D = x_ref.shape
    Hdq = wq_ref.shape[1]
    H = headsum_ref.shape[1]
    Hdv = expand_ref.shape[1]
    cd = compute_dtype

    x2d = x_ref[...].astype(cd).reshape(TB * S, D)
    # Query row (position `idx`) straight from the resident VMEM slab (cheap re-read;
    # a dedicated BoundedSlice spec is the TODO above).
    x_t = x_ref[:, pl.ds(idx, 1), :].reshape(TB, D).astype(cd)

    # ---- projections: all TB / TB*S rows in one MXU matmul each ----
    tq = jnp.dot(x_t, wq_ref[...].astype(cd),
                 preferred_element_type=jnp.float32)                       # (TB, Hdq)
    k = jnp.dot(x2d, wk_ref[...].astype(cd),
                preferred_element_type=jnp.float32)                        # (TB*S, Hdq)
    v = jnp.dot(x2d, wv_ref[...].astype(cd),
                preferred_element_type=jnp.float32)                        # (TB*S, Hdv)

    # element-wise q*k, then per-HEAD column sums (1/sqrt(d_k) folded in) via one
    # small MXU matmul against the host-precomputed (Hdq, H) matrix
    prod = (tq[:, None, :] * k.reshape(TB, S, Hdq)).reshape(TB * S, Hdq)
    logits = jnp.dot(prod.astype(cd), headsum_ref[...].astype(cd),
                     preferred_element_type=jnp.float32).reshape(TB, S, H)

    # causal mask over positions > idx, built (TB, S, 1) and broadcast across heads
    pos = jax.lax.broadcasted_iota(jnp.int32, (TB, S, 1), 1)
    neg_big = jnp.finfo(jnp.float32).min * 0.5
    logits = jnp.where(pos <= idx, logits, neg_big)

    # masked softmax over the sequence axis — per head only (no d_v redundancy)
    m = jnp.max(logits, axis=1, keepdims=True)                             # (TB, 1, H)
    e = jnp.exp(logits - m)
    denom = jnp.sum(e, axis=1, keepdims=True)
    w = e * pl.reciprocal(denom, approx=True)                              # (TB, S, H)

    # expand per-head weights across d_v channels (one tiny matmul) and reduce over S
    w_exp = jnp.dot(w.reshape(TB * S, H).astype(cd), expand_ref[...].astype(cd),
                    preferred_element_type=jnp.float32).reshape(TB, S, Hdv)
    concat = jnp.sum(w_exp * v.reshape(TB, S, Hdv), axis=1)                # (TB, Hdv)

    # ---- attention output projection + layernorm ----
    attn = jnp.dot(concat.astype(cd), fcw_ref[...].astype(cd),
                   preferred_element_type=jnp.float32) + fcb_ref[...]      # (TB, D)
    mu = jnp.mean(attn, axis=-1, keepdims=True)
    var = jnp.mean((attn - mu) ** 2, axis=-1, keepdims=True)
    attn_ln = (attn - mu) * jax.lax.rsqrt(var + eps) * ln1g_ref[...] + ln1b_ref[...]

    # ---- feed forward (dropout == identity in eval) ----
    h1 = jnp.dot(attn_ln.astype(cd), win_ref[...].astype(cd),
                 preferred_element_type=jnp.float32) + bin_ref[...]        # (TB, inner)
    h1 = jnp.maximum(h1, 0.0)
    h2 = jnp.dot(h1.astype(cd), wout_ref[...].astype(cd),
                 preferred_element_type=jnp.float32) + bout_ref[...]       # (TB, D)
    mu2 = jnp.mean(h2, axis=-1, keepdims=True)
    var2 = jnp.mean((h2 - mu2) ** 2, axis=-1, keepdims=True)
    out = (h2 - mu2) * jax.lax.rsqrt(var2 + eps) * ln2g_ref[...] + ln2b_ref[...]

    o_ref[...] = out.astype(o_ref.dtype)                                   # lane-dense (TB, D)


def _make_head_matrices(heads, d_q, d_k, d_v, dtype=jnp.float32):
    """Host-precomputed per-head column-sum / expansion matrices (constants)."""
    inv_disc = 1.0 / np.power(d_k, 0.5)
    headsum = np.kron(np.eye(heads), np.ones((d_q, 1))) * inv_disc   # (H*d_q, H)
    expand = np.kron(np.eye(heads), np.ones((1, d_v)))               # (H, H*d_v)
    return jnp.asarray(headsum, dtype), jnp.asarray(expand, dtype)


def _pick_tb(B):
    # Prefer multiples of 8 that leave >= 2 grid steps (so v7x's two TensorCores
    # both get work under "parallel"); otherwise the largest multiple of 8 that
    # divides B; otherwise the whole batch in one step (toy sizes).
    for t in (256, 128, 64, 32, 16, 8):
        if B % t == 0 and B // t >= 2:
            return t
    for t in (256, 128, 64, 32, 16, 8):
        if B % t == 0:
            return t
    return B


def _vmem_limit_bytes(TB, S, D, Hdq, Hdk, Hdv, H, inner, bytes_per=4):
    weights = (D * (Hdq + Hdk + Hdv) + Hdq * H + H * Hdv + Hdv * D
               + 2 * D * inner) * bytes_per
    biases = (7 * D + inner) * bytes_per
    io = (2 * TB * S * D + 2 * TB * D) * bytes_per                 # pipelined x + out
    acts = (TB * S * (2 * D + Hdq + Hdk + 3 * Hdv + 2 * H)
            + TB * (inner + 4 * D)) * bytes_per
    est = 2 * (weights + biases + io + acts)                       # 2x margin
    return int(min(max(est, 32 * 1024 * 1024), 64 * 1024 * 1024))


def transformer_forward(x, index, params, *, heads, d_q, d_k, d_v,
                        compute_dtype=jnp.float32):
    B, S, D = x.shape
    assert d_q == d_k, "q*k elementwise product requires d_q == d_k"
    Hdq, Hdk, Hdv = heads * d_q, heads * d_k, heads * d_v
    inner = params["w_in"].shape[1]

    # Clamp index into [0, S-1]: pl.ds on a VMEM ref has no bounds check.
    idx_arr = jnp.clip(jnp.asarray(index, jnp.int32), 0, S - 1).reshape(1)

    TB = _pick_tb(B)
    headsum, expand = _make_head_matrices(heads, d_q, d_k, d_v)
    kernel = functools.partial(transformer_kernel, compute_dtype=compute_dtype)
    vmem_limit = _vmem_limit_bytes(TB, S, D, Hdq, Hdk, Hdv, heads, inner)

    args = (idx_arr, x,
            params["wq"], params["wk"], params["wv"], headsum, expand,
            params["fc_w"], params["fc_b"], params["ln1_g"], params["ln1_b"],
            params["w_in"], params["b_in"], params["w_out"], params["b_out"],
            params["ln2_g"], params["ln2_b"])

    def build(single_buffer_weights):
        w_mode = pl.Buffered(1) if single_buffer_weights else None

        def wspec(shape):
            imap = lambda b, i: (0,) * len(shape)
            if w_mode is None:
                return pl.BlockSpec(shape, imap)
            return pl.BlockSpec(shape, imap, pipeline_mode=w_mode)

        grid_spec = pltpu.PrefetchScalarGridSpec(
            num_scalar_prefetch=1,
            grid=(B // TB,),
            in_specs=[
                pl.BlockSpec((TB, S, D), lambda b, i: (b, 0, 0)),
                wspec((D, Hdq)), wspec((D, Hdk)), wspec((D, Hdv)),
                wspec((Hdq, heads)), wspec((heads, Hdv)),
                wspec((Hdv, D)), wspec((1, D)), wspec((1, D)), wspec((1, D)),
                wspec((D, inner)), wspec((1, inner)),
                wspec((inner, D)), wspec((1, D)), wspec((1, D)), wspec((1, D)),
            ],
            out_specs=pl.BlockSpec((TB, D), lambda b, i: (b, 0)),
        )
        return pl.pallas_call(
            kernel,
            out_shape=jax.ShapeDtypeStruct((B, D), jnp.float32),
            grid_spec=grid_spec,
            compiler_params=pltpu.CompilerParams(
                dimension_semantics=("parallel",),     # batch rows independent -> megacore
                vmem_limit_bytes=vmem_limit),
        )

    try:
        out2d = build(True)(*args)
    except Exception:
        # Fallback for JAX builds that reject buffer_count=1 on grid-invariant inputs.
        out2d = build(False)(*args)

    return out2d.reshape(B, 1, D)   # match the module's (batch, 1, model_dim) output


def transformer_ref(x, index, params, heads, d_q, d_k, d_v, eps=1e-5):
    """Pure-JAX reference mirroring the PyTorch forward (eval mode)."""
    inv = x[:, :index + 1, :]
    q = inv @ params["wq"]; k = inv @ params["wk"]; v = inv @ params["wv"]
    tq = q[:, index:index + 1, :]
    prod = tq * k
    disc = np.power(d_k, 0.5)
    outs = []
    for h in range(heads):
        lg = prod[:, :, h * d_q:(h + 1) * d_q].sum(-1) / disc
        w = jax.nn.softmax(lg, axis=1)[:, :, None]
        outs.append((v[:, :, h * d_v:(h + 1) * d_v] * w).sum(1, keepdims=True))
    concat = jnp.concatenate(outs, axis=-1)

    def ln(z, g, b):
        mu = z.mean(-1, keepdims=True)
        var = ((z - mu) ** 2).mean(-1, keepdims=True)
        return (z - mu) / jnp.sqrt(var + eps) * g + b

    attn = ln(concat @ params["fc_w"] + params["fc_b"], params["ln1_g"], params["ln1_b"])
    h1 = jnp.maximum(attn @ params["w_in"] + params["b_in"], 0.0)
    h2 = h1 @ params["w_out"] + params["b_out"]
    return ln(h2, params["ln2_g"], params["ln2_b"])


def init_params(key, model_dim, inner_dim, heads, d_q, d_k, d_v):
    ks = jax.random.split(key, 8)
    f32 = jnp.float32
    return {
        "wq": jax.random.normal(ks[0], (model_dim, heads * d_q), f32),
        "wk": jax.random.normal(ks[1], (model_dim, heads * d_k), f32),
        "wv": jax.random.normal(ks[2], (model_dim, heads * d_v), f32),
        "fc_w": 0.1 * jax.random.normal(ks[3], (heads * d_v, model_dim), f32),
        "fc_b": 0.1 * jax.random.normal(ks[4], (1, model_dim), f32),
        "ln1_g": jnp.ones((1, model_dim), f32),
        "ln1_b": jnp.zeros((1, model_dim), f32),
        "w_in": 0.1 * jax.random.normal(ks[5], (model_dim, inner_dim), f32),
        "b_in": 0.1 * jax.random.normal(ks[6], (1, inner_dim), f32),
        "w_out": 0.1 * jax.random.normal(ks[7], (inner_dim, model_dim), f32),
        "b_out": jnp.zeros((1, model_dim), f32),
        "ln2_g": jnp.ones((1, model_dim), f32),
        "ln2_b": jnp.zeros((1, model_dim), f32),
    }


if __name__ == "__main__":
    B, S, model_dim, inner_dim = 2, 8, 32, 64
    heads, d_q, d_k, d_v = 4, 8, 8, 8
    index = 5

    key = jax.random.PRNGKey(0)
    kx, kp = jax.random.split(key)
    x = jax.random.normal(kx, (B, S, model_dim), jnp.float32)
    params = init_params(kp, model_dim, inner_dim, heads, d_q, d_k, d_v)

    out = transformer_forward(x, index, params, heads=heads, d_q=d_q, d_k=d_k, d_v=d_v)
    out = jax.block_until_ready(out)

    ref = transformer_ref(x, index, params, heads, d_q, d_k, d_v)
    assert out.shape == (B, 1, model_dim)
    # tolerance slightly looser than pure-f32 because the softmax denominator
    # uses the EUP approximate reciprocal (pl.reciprocal(approx=True)).
    np.testing.assert_allclose(np.asarray(out), np.asarray(ref), rtol=5e-3, atol=5e-3)

    print("KERNEL_OK")
</pallas_src>

<mosaic_0001>
module attributes {stable_mosaic.version = 11 : i64} {
  func.func @transformer_kernel(%arg0: i32, %arg1: memref<1xi32, #tpu.memory_space<smem>>, %arg2: memref<2x8x32xf32, #tpu.memory_space<vmem>>, %arg3: memref<32x32xf32, #tpu.memory_space<vmem>>, %arg4: memref<32x32xf32, #tpu.memory_space<vmem>>, %arg5: memref<32x32xf32, #tpu.memory_space<vmem>>, %arg6: memref<32x4xf32, #tpu.memory_space<vmem>>, %arg7: memref<4x32xf32, #tpu.memory_space<vmem>>, %arg8: memref<32x32xf32, #tpu.memory_space<vmem>>, %arg9: memref<1x32xf32, #tpu.memory_space<vmem>>, %arg10: memref<1x32xf32, #tpu.memory_space<vmem>>, %arg11: memref<1x32xf32, #tpu.memory_space<vmem>>, %arg12: memref<32x64xf32, #tpu.memory_space<vmem>>, %arg13: memref<1x64xf32, #tpu.memory_space<vmem>>, %arg14: memref<64x32xf32, #tpu.memory_space<vmem>>, %arg15: memref<1x32xf32, #tpu.memory_space<vmem>>, %arg16: memref<1x32xf32, #tpu.memory_space<vmem>>, %arg17: memref<1x32xf32, #tpu.memory_space<vmem>>, %arg18: memref<2x32xf32, #tpu.memory_space<vmem>>) attributes {dimension_semantics = [#tpu.dimension_semantics<parallel>], iteration_bounds = array<i64: 1>, scalar_prefetch = 1 : i64, scratch_operands = 0 : i64, tpu.core_type = #tpu.core_type<tc>, window_params = [{transform_indices = @transform_0, window_bounds = array<i64: 2, 8, 32>}, {pipeline_mode = #tpu.pipeline_mode<synchronous>, transform_indices = @transform_1, window_bounds = array<i64: 32, 32>}, {pipeline_mode = #tpu.pipeline_mode<synchronous>, transform_indices = @transform_2, window_bounds = array<i64: 32, 32>}, {pipeline_mode = #tpu.pipeline_mode<synchronous>, transform_indices = @transform_3, window_bounds = array<i64: 32, 32>}, {pipeline_mode = #tpu.pipeline_mode<synchronous>, transform_indices = @transform_4, window_bounds = array<i64: 32, 4>}, {pipeline_mode = #tpu.pipeline_mode<synchronous>, transform_indices = @transform_5, window_bounds = array<i64: 4, 32>}, {pipeline_mode = #tpu.pipeline_mode<synchronous>, transform_indices = @transform_6, window_bounds = array<i64: 32, 32>}, {pipeline_mode = #tpu.pipeline_mode<synchronous>, transform_indices = @transform_7, window_bounds = array<i64: 1, 32>}, {pipeline_mode = #tpu.pipeline_mode<synchronous>, transform_indices = @transform_8, window_bounds = array<i64: 1, 32>}, {pipeline_mode = #tpu.pipeline_mode<synchronous>, transform_indices = @transform_9, window_bounds = array<i64: 1, 32>}, {pipeline_mode = #tpu.pipeline_mode<synchronous>, transform_indices = @transform_10, window_bounds = array<i64: 32, 64>}, {pipeline_mode = #tpu.pipeline_mode<synchronous>, transform_indices = @transform_11, window_bounds = array<i64: 1, 64>}, {pipeline_mode = #tpu.pipeline_mode<synchronous>, transform_indices = @transform_12, window_bounds = array<i64: 64, 32>}, {pipeline_mode = #tpu.pipeline_mode<synchronous>, transform_indices = @transform_13, window_bounds = array<i64: 1, 32>}, {pipeline_mode = #tpu.pipeline_mode<synchronous>, transform_indices = @transform_14, window_bounds = array<i64: 1, 32>}, {pipeline_mode = #tpu.pipeline_mode<synchronous>, transform_indices = @transform_15, window_bounds = array<i64: 1, 32>}, {transform_indices = @transform_16, window_bounds = array<i64: 2, 32>}]} {
    %c0 = arith.constant 0 : index
    %0 = memref.load %arg1[%c0] : memref<1xi32, #tpu.memory_space<smem>>
    %c0_0 = arith.constant 0 : index
    %c0_1 = arith.constant 0 : index
    %c0_2 = arith.constant 0 : index
    %1 = vector.load %arg2[%c0_0, %c0_1, %c0_2] : memref<2x8x32xf32, #tpu.memory_space<vmem>>, vector<2x8x32xf32>
    %2 = vector.shape_cast %1 : vector<2x8x32xf32> to vector<16x32xf32>
    %c0_3 = arith.constant 0 : index
    %3 = arith.index_cast %0 : i32 to index
    %c0_4 = arith.constant 0 : index
    %4 = vector.load %arg2[%c0_3, %3, %c0_4] : memref<2x8x32xf32, #tpu.memory_space<vmem>>, vector<2x1x32xf32>
    %5 = vector.shape_cast %4 : vector<2x1x32xf32> to vector<2x32xf32>
    %c0_5 = arith.constant 0 : index
    %c0_6 = arith.constant 0 : index
    %6 = vector.load %arg3[%c0_5, %c0_6] : memref<32x32xf32, #tpu.memory_space<vmem>>, vector<32x32xf32>
    %cst = arith.constant dense<0.000000e+00> : vector<2x32xf32>
    %7 = tpu.matmul %5, %6, %cst {dimension_numbers = #tpu.dot_dimension_numbers<[1], [0], [0], [1], [0, 0, 1, 1], [], []>} : vector<2x32xf32>, vector<32x32xf32>, vector<2x32xf32> -> vector<2x32xf32>
    %c0_7 = arith.constant 0 : index
    %c0_8 = arith.constant 0 : index
    %8 = vector.load %arg4[%c0_7, %c0_8] : memref<32x32xf32, #tpu.memory_space<vmem>>, vector<32x32xf32>
    %cst_9 = arith.constant dense<0.000000e+00> : vector<16x32xf32>
    %9 = tpu.matmul %2, %8, %cst_9 {dimension_numbers = #tpu.dot_dimension_numbers<[1], [0], [0], [1], [0, 0, 1, 1], [], []>} : vector<16x32xf32>, vector<32x32xf32>, vector<16x32xf32> -> vector<16x32xf32>
    %c0_10 = arith.constant 0 : index
    %c0_11 = arith.constant 0 : index
    %10 = vector.load %arg5[%c0_10, %c0_11] : memref<32x32xf32, #tpu.memory_space<vmem>>, vector<32x32xf32>
    %cst_12 = arith.constant dense<0.000000e+00> : vector<16x32xf32>
    %11 = tpu.matmul %2, %10, %cst_12 {dimension_numbers = #tpu.dot_dimension_numbers<[1], [0], [0], [1], [0, 0, 1, 1], [], []>} : vector<16x32xf32>, vector<32x32xf32>, vector<16x32xf32> -> vector<16x32xf32>
    %12 = vector.shape_cast %7 : vector<2x32xf32> to vector<2x1x32xf32>
    %13 = vector.shape_cast %9 : vector<16x32xf32> to vector<2x8x32xf32>
    %14 = vector.broadcast %12 : vector<2x1x32xf32> to vector<2x8x32xf32>
    %15 = arith.mulf %14, %13 : vector<2x8x32xf32>
    %16 = vector.shape_cast %15 : vector<2x8x32xf32> to vector<16x32xf32>
    %c0_13 = arith.constant 0 : index
    %c0_14 = arith.constant 0 : index
    %17 = vector.load %arg6[%c0_13, %c0_14] : memref<32x4xf32, #tpu.memory_space<vmem>>, vector<32x4xf32>
    %cst_15 = arith.constant dense<0.000000e+00> : vector<16x4xf32>
    %18 = tpu.matmul %16, %17, %cst_15 {dimension_numbers = #tpu.dot_dimension_numbers<[1], [0], [0], [1], [0, 0, 1, 1], [], []>} : vector<16x32xf32>, vector<32x4xf32>, vector<16x4xf32> -> vector<16x4xf32>
    %19 = vector.shape_cast %18 : vector<16x4xf32> to vector<2x8x4xf32>
    %20 = tpu.iota {dimensions = array<i32: 1>} : vector<2x8x1xi32>
    %21 = vector.broadcast %0 : i32 to vector<2x8x1xi32>
    %22 = arith.cmpi sle, %20, %21 : vector<2x8x1xi32>
    %cst_16 = arith.constant -1.70141173E+38 : f32
    %23 = vector.shape_cast %22 : vector<2x8x1xi1> to vector<2x8x1xi1>
    %24 = vector.broadcast %23 : vector<2x8x1xi1> to vector<2x8x4xi1>
    %25 = vector.broadcast %cst_16 : f32 to vector<2x8x4xf32>
    %26 = arith.select %24, %19, %25 : vector<2x8x4xi1>, vector<2x8x4xf32>
    %cst_17 = arith.constant dense<0xFF800000> : vector<2x4xf32>
    %27 = vector.multi_reduction <maximumf>, %26, %cst_17 [1] : vector<2x8x4xf32> to vector<2x4xf32>
    %28 = vector.shape_cast %27 : vector<2x4xf32> to vector<2x1x4xf32>
    %29 = vector.broadcast %28 : vector<2x1x4xf32> to vector<2x8x4xf32>
    %30 = arith.subf %26, %29 : vector<2x8x4xf32>
    %31 = math.exp %30 : vector<2x8x4xf32>
    %cst_18 = arith.constant dense<0.000000e+00> : vector<2x4xf32>
    %32 = vector.multi_reduction <add>, %31, %cst_18 [1] : vector<2x8x4xf32> to vector<2x4xf32>
    %33 = vector.shape_cast %32 : vector<2x4xf32> to vector<2x1x4xf32>
    %34 = tpu.reciprocal %33 {approx = true} : vector<2x1x4xf32> -> vector<2x1x4xf32>
    %35 = vector.broadcast %34 : vector<2x1x4xf32> to vector<2x8x4xf32>
    %36 = arith.mulf %31, %35 : vector<2x8x4xf32>
    %37 = vector.shape_cast %36 : vector<2x8x4xf32> to vector<16x4xf32>
    %c0_19 = arith.constant 0 : index
    %c0_20 = arith.constant 0 : index
    %38 = vector.load %arg7[%c0_19, %c0_20] : memref<4x32xf32, #tpu.memory_space<vmem>>, vector<4x32xf32>
    %cst_21 = arith.constant dense<0.000000e+00> : vector<16x32xf32>
    %39 = tpu.matmul %37, %38, %cst_21 {dimension_numbers = #tpu.dot_dimension_numbers<[1], [0], [0], [1], [0, 0, 1, 1], [], []>} : vector<16x4xf32>, vector<4x32xf32>, vector<16x32xf32> -> vector<16x32xf32>
    %40 = vector.shape_cast %39 : vector<16x32xf32> to vector<2x8x32xf32>
    %41 = vector.shape_cast %11 : vector<16x32xf32> to vector<2x8x32xf32>
    %42 = arith.mulf %40, %41 : vector<2x8x32xf32>
    %cst_22 = arith.constant dense<0.000000e+00> : vector<2x32xf32>
    %43 = vector.multi_reduction <add>, %42, %cst_22 [1] : vector<2x8x32xf32> to vector<2x32xf32>
    %c0_23 = arith.constant 0 : index
    %c0_24 = arith.constant 0 : index
    %44 = vector.load %arg8[%c0_23, %c0_24] : memref<32x32xf32, #tpu.memory_space<vmem>>, vector<32x32xf32>
    %cst_25 = arith.constant dense<0.000000e+00> : vector<2x32xf32>
    %45 = tpu.matmul %43, %44, %cst_25 {dimension_numbers = #tpu.dot_dimension_numbers<[1], [0], [0], [1], [0, 0, 1, 1], [], []>} : vector<2x32xf32>, vector<32x32xf32>, vector<2x32xf32> -> vector<2x32xf32>
    %c0_26 = arith.constant 0 : index
    %c0_27 = arith.constant 0 : index
    %46 = vector.load %arg9[%c0_26, %c0_27] : memref<1x32xf32, #tpu.memory_space<vmem>>, vector<1x32xf32>
    %47 = vector.broadcast %46 : vector<1x32xf32> to vector<2x32xf32>
    %48 = arith.addf %45, %47 : vector<2x32xf32>
    %cst_28 = arith.constant dense<0.000000e+00> : vector<2xf32>
    %49 = vector.multi_reduction <add>, %48, %cst_28 [1] : vector<2x32xf32> to vector<2xf32>
    %50 = vector.shape_cast %49 : vector<2xf32> to vector<2x1xf32>
    %cst_29 = arith.constant 3.200000e+01 : f32
    %51 = vector.broadcast %cst_29 : f32 to vector<2x1xf32>
    %52 = arith.divf %50, %51 : vector<2x1xf32>
    %53 = vector.broadcast %52 : vector<2x1xf32> to vector<2x32xf32>
    %54 = arith.subf %48, %53 : vector<2x32xf32>
    %55 = arith.mulf %54, %54 : vector<2x32xf32>
    %cst_30 = arith.constant dense<0.000000e+00> : vector<2xf32>
    %56 = vector.multi_reduction <add>, %55, %cst_30 [1] : vector<2x32xf32> to vector<2xf32>
    %57 = vector.shape_cast %56 : vector<2xf32> to vector<2x1xf32>
    %cst_31 = arith.constant 3.200000e+01 : f32
    %58 = vector.broadcast %cst_31 : f32 to vector<2x1xf32>
    %59 = arith.divf %57, %58 : vector<2x1xf32>
    %60 = vector.broadcast %52 : vector<2x1xf32> to vector<2x32xf32>
    %61 = arith.subf %48, %60 : vector<2x32xf32>
    %cst_32 = arith.constant 9.99999974E-6 : f32
    %62 = vector.broadcast %cst_32 : f32 to vector<2x1xf32>
    %63 = arith.addf %59, %62 : vector<2x1xf32>
    %64 = math.rsqrt %63 : vector<2x1xf32>
    %65 = vector.broadcast %64 : vector<2x1xf32> to vector<2x32xf32>
    %66 = arith.mulf %61, %65 : vector<2x32xf32>
    %c0_33 = arith.constant 0 : index
    %c0_34 = arith.constant 0 : index
    %67 = vector.load %arg10[%c0_33, %c0_34] : memref<1x32xf32, #tpu.memory_space<vmem>>, vector<1x32xf32>
    %68 = vector.broadcast %67 : vector<1x32xf32> to vector<2x32xf32>
    %69 = arith.mulf %66, %68 : vector<2x32xf32>
    %c0_35 = arith.constant 0 : index
    %c0_36 = arith.constant 0 : index
    %70 = vector.load %arg11[%c0_35, %c0_36] : memref<1x32xf32, #tpu.memory_space<vmem>>, vector<1x32xf32>
    %71 = vector.broadcast %70 : vector<1x32xf32> to vector<2x32xf32>
    %72 = arith.addf %69, %71 : vector<2x32xf32>
    %c0_37 = arith.constant 0 : index
    %c0_38 = arith.constant 0 : index
    %73 = vector.load %arg12[%c0_37, %c0_38] : memref<32x64xf32, #tpu.memory_space<vmem>>, vector<32x64xf32>
    %cst_39 = arith.constant dense<0.000000e+00> : vector<2x64xf32>
    %74 = tpu.matmul %72, %73, %cst_39 {dimension_numbers = #tpu.dot_dimension_numbers<[1], [0], [0], [1], [0, 0, 1, 1], [], []>} : vector<2x32xf32>, vector<32x64xf32>, vector<2x64xf32> -> vector<2x64xf32>
    %c0_40 = arith.constant 0 : index
    %c0_41 = arith.constant 0 : index
    %75 = vector.load %arg13[%c0_40, %c0_41] : memref<1x64xf32, #tpu.memory_space<vmem>>, vector<1x64xf32>
    %76 = vector.broadcast %75 : vector<1x64xf32> to vector<2x64xf32>
    %77 = arith.addf %74, %76 : vector<2x64xf32>
    %cst_42 = arith.constant 0.000000e+00 : f32
    %78 = vector.broadcast %cst_42 : f32 to vector<2x64xf32>
    %79 = arith.maximumf %77, %78 : vector<2x64xf32>
    %c0_43 = arith.constant 0 : index
    %c0_44 = arith.constant 0 : index
    %80 = vector.load %arg14[%c0_43, %c0_44] : memref<64x32xf32, #tpu.memory_space<vmem>>, vector<64x32xf32>
    %cst_45 = arith.constant dense<0.000000e+00> : vector<2x32xf32>
    %81 = tpu.matmul %79, %80, %cst_45 {dimension_numbers = #tpu.dot_dimension_numbers<[1], [0], [0], [1], [0, 0, 1, 1], [], []>} : vector<2x64xf32>, vector<64x32xf32>, vector<2x32xf32> -> vector<2x32xf32>
    %c0_46 = arith.constant 0 : index
    %c0_47 = arith.constant 0 : index
    %82 = vector.load %arg15[%c0_46, %c0_47] : memref<1x32xf32, #tpu.memory_space<vmem>>, vector<1x32xf32>
    %83 = vector.broadcast %82 : vector<1x32xf32> to vector<2x32xf32>
    %84 = arith.addf %81, %83 : vector<2x32xf32>
    %cst_48 = arith.constant dense<0.000000e+00> : vector<2xf32>
    %85 = vector.multi_reduction <add>, %84, %cst_48 [1] : vector<2x32xf32> to vector<2xf32>
    %86 = vector.shape_cast %85 : vector<2xf32> to vector<2x1xf32>
    %cst_49 = arith.constant 3.200000e+01 : f32
    %87 = vector.broadcast %cst_49 : f32 to vector<2x1xf32>
    %88 = arith.divf %86, %87 : vector<2x1xf32>
    %89 = vector.broadcast %88 : vector<2x1xf32> to vector<2x32xf32>
    %90 = arith.subf %84, %89 : vector<2x32xf32>
    %91 = arith.mulf %90, %90 : vector<2x32xf32>
    %cst_50 = arith.constant dense<0.000000e+00> : vector<2xf32>
    %92 = vector.multi_reduction <add>, %91, %cst_50 [1] : vector<2x32xf32> to vector<2xf32>
    %93 = vector.shape_cast %92 : vector<2xf32> to vector<2x1xf32>
    %cst_51 = arith.constant 3.200000e+01 : f32
    %94 = vector.broadcast %cst_51 : f32 to vector<2x1xf32>
    %95 = arith.divf %93, %94 : vector<2x1xf32>
    %96 = vector.broadcast %88 : vector<2x1xf32> to vector<2x32xf32>
    %97 = arith.subf %84, %96 : vector<2x32xf32>
    %cst_52 = arith.constant 9.99999974E-6 : f32
    %98 = vector.broadcast %cst_52 : f32 to vector<2x1xf32>
    %99 = arith.addf %95, %98 : vector<2x1xf32>
    %100 = math.rsqrt %99 : vector<2x1xf32>
    %101 = vector.broadcast %100 : vector<2x1xf32> to vector<2x32xf32>
    %102 = arith.mulf %97, %101 : vector<2x32xf32>
    %c0_53 = arith.constant 0 : index
    %c0_54 = arith.constant 0 : index
    %103 = vector.load %arg16[%c0_53, %c0_54] : memref<1x32xf32, #tpu.memory_space<vmem>>, vector<1x32xf32>
    %104 = vector.broadcast %103 : vector<1x32xf32> to vector<2x32xf32>
    %105 = arith.mulf %102, %104 : vector<2x32xf32>
    %c0_55 = arith.constant 0 : index
    %c0_56 = arith.constant 0 : index
    %106 = vector.load %arg17[%c0_55, %c0_56] : memref<1x32xf32, #tpu.memory_space<vmem>>, vector<1x32xf32>
    %107 = vector.broadcast %106 : vector<1x32xf32> to vector<2x32xf32>
    %108 = arith.addf %105, %107 : vector<2x32xf32>
    %c0_57 = arith.constant 0 : index
    %c0_58 = arith.constant 0 : index
    %109 = vector.load %arg18[%c0_57, %c0_58] : memref<2x32xf32, #tpu.memory_space<vmem>>, vector<2x32xf32>
    tpu.vector_store %arg18[%c0_57, %c0_58], %108 {strides = array<i32>} : memref<2x32xf32, #tpu.memory_space<vmem>>, vector<2x32xf32>,
    return
  }
  func.func @transform_0(%arg0: i32, %arg1: memref<1xi32, #tpu.memory_space<smem>>) -> (i32, i32, i32) {
    %c0_i32 = arith.constant 0 : i32
    %c0_i32_0 = arith.constant 0 : i32
    %c0_i32_1 = arith.constant 0 : i32
    return %arg0, %c0_i32, %c0_i32_0 : i32, i32, i32
  }
  func.func @transform_1(%arg0: i32, %arg1: memref<1xi32, #tpu.memory_space<smem>>) -> (i32, i32) {
    %c0_i32 = arith.constant 0 : i32
    %c0_i32_0 = arith.constant 0 : i32
    %c0_i32_1 = arith.constant 0 : i32
    return %c0_i32, %c0_i32_0 : i32, i32
  }
  func.func @transform_2(%arg0: i32, %arg1: memref<1xi32, #tpu.memory_space<smem>>) -> (i32, i32) {
    %c0_i32 = arith.constant 0 : i32
    %c0_i32_0 = arith.constant 0 : i32
    %c0_i32_1 = arith.constant 0 : i32
    return %c0_i32, %c0_i32_0 : i32, i32
  }
  func.func @transform_3(%arg0: i32, %arg1: memref<1xi32, #tpu.memory_space<smem>>) -> (i32, i32) {
    %c0_i32 = arith.constant 0 : i32
    %c0_i32_0 = arith.constant 0 : i32
    %c0_i32_1 = arith.constant 0 : i32
    return %c0_i32, %c0_i32_0 : i32, i32
  }
  func.func @transform_4(%arg0: i32, %arg1: memref<1xi32, #tpu.memory_space<smem>>) -> (i32, i32) {
    %c0_i32 = arith.constant 0 : i32
    %c0_i32_0 = arith.constant 0 : i32
    %c0_i32_1 = arith.constant 0 : i32
    return %c0_i32, %c0_i32_0 : i32, i32
  }
  func.func @transform_5(%arg0: i32, %arg1: memref<1xi32, #tpu.memory_space<smem>>) -> (i32, i32) {
    %c0_i32 = arith.constant 0 : i32
    %c0_i32_0 = arith.constant 0 : i32
    %c0_i32_1 = arith.constant 0 : i32
    return %c0_i32, %c0_i32_0 : i32, i32
  }
  func.func @transform_6(%arg0: i32, %arg1: memref<1xi32, #tpu.memory_space<smem>>) -> (i32, i32) {
    %c0_i32 = arith.constant 0 : i32
    %c0_i32_0 = arith.constant 0 : i32
    %c0_i32_1 = arith.constant 0 : i32
    return %c0_i32, %c0_i32_0 : i32, i32
  }
  func.func @transform_7(%arg0: i32, %arg1: memref<1xi32, #tpu.memory_space<smem>>) -> (i32, i32) {
    %c0_i32 = arith.constant 0 : i32
    %c0_i32_0 = arith.constant 0 : i32
    %c0_i32_1 = arith.constant 0 : i32
    return %c0_i32, %c0_i32_0 : i32, i32
  }
  func.func @transform_8(%arg0: i32, %arg1: memref<1xi32, #tpu.memory_space<smem>>) -> (i32, i32) {
    %c0_i32 = arith.constant 0 : i32
    %c0_i32_0 = arith.constant 0 : i32
    %c0_i32_1 = arith.constant 0 : i32
    return %c0_i32, %c0_i32_0 : i32, i32
  }
  func.func @transform_9(%arg0: i32, %arg1: memref<1xi32, #tpu.memory_space<smem>>) -> (i32, i32) {
    %c0_i32 = arith.constant 0 : i32
    %c0_i32_0 = arith.constant 0 : i32
    %c0_i32_1 = arith.constant 0 : i32
    return %c0_i32, %c0_i32_0 : i32, i32
  }
  func.func @transform_10(%arg0: i32, %arg1: memref<1xi32, #tpu.memory_space<smem>>) -> (i32, i32) {
    %c0_i32 = arith.constant 0 : i32
    %c0_i32_0 = arith.constant 0 : i32
    %c0_i32_1 = arith.constant 0 : i32
    return %c0_i32, %c0_i32_0 : i32, i32
  }
  func.func @transform_11(%arg0: i32, %arg1: memref<1xi32, #tpu.memory_space<smem>>) -> (i32, i32) {
    %c0_i32 = arith.constant 0 : i32
    %c0_i32_0 = arith.constant 0 : i32
    %c0_i32_1 = arith.constant 0 : i32
    return %c0_i32, %c0_i32_0 : i32, i32
  }
  func.func @transform_12(%arg0: i32, %arg1: memref<1xi32, #tpu.memory_space<smem>>) -> (i32, i32) {
    %c0_i32 = arith.constant 0 : i32
    %c0_i32_0 = arith.constant 0 : i32
    %c0_i32_1 = arith.constant 0 : i32
    return %c0_i32, %c0_i32_0 : i32, i32
  }
  func.func @transform_13(%arg0: i32, %arg1: memref<1xi32, #tpu.memory_space<smem>>) -> (i32, i32) {
    %c0_i32 = arith.constant 0 : i32
    %c0_i32_0 = arith.constant 0 : i32
    %c0_i32_1 = arith.constant 0 : i32
    return %c0_i32, %c0_i32_0 : i32, i32
  }
  func.func @transform_14(%arg0: i32, %arg1: memref<1xi32, #tpu.memory_space<smem>>) -> (i32, i32) {
    %c0_i32 = arith.constant 0 : i32
    %c0_i32_0 = arith.constant 0 : i32
    %c0_i32_1 = arith.constant 0 : i32
    return %c0_i32, %c0_i32_0 : i32, i32
  }
  func.func @transform_15(%arg0: i32, %arg1: memref<1xi32, #tpu.memory_space<smem>>) -> (i32, i32) {
    %c0_i32 = arith.constant 0 : i32
    %c0_i32_0 = arith.constant 0 : i32
    %c0_i32_1 = arith.constant 0 : i32
    return %c0_i32, %c0_i32_0 : i32, i32
  }
  func.func @transform_16(%arg0: i32, %arg1: memref<1xi32, #tpu.memory_space<smem>>) -> (i32, i32) {
    %c0_i32 = arith.constant 0 : i32
    %c0_i32_0 = arith.constant 0 : i32
    return %arg0, %c0_i32 : i32, i32
  }
}

module attributes {stable_mosaic.version = 11 : i64} {
  func.func @transformer_kernel(%arg0: i32, %arg1: memref<1xi32, #tpu.memory_space<smem>>, %arg2: memref<2x8x32xf32, #tpu.memory_space<vmem>>, %arg3: memref<32x32xf32, #tpu.memory_space<vmem>>, %arg4: memref<32x32xf32, #tpu.memory_space<vmem>>, %arg5: memref<32x32xf32, #tpu.memory_space<vmem>>, %arg6: memref<32x4xf32, #tpu.memory_space<vmem>>, %arg7: memref<4x32xf32, #tpu.memory_space<vmem>>, %arg8: memref<32x32xf32, #tpu.memory_space<vmem>>, %arg9: memref<1x32xf32, #tpu.memory_space<vmem>>, %arg10: memref<1x32xf32, #tpu.memory_space<vmem>>, %arg11: memref<1x32xf32, #tpu.memory_space<vmem>>, %arg12: memref<32x64xf32, #tpu.memory_space<vmem>>, %arg13: memref<1x64xf32, #tpu.memory_space<vmem>>, %arg14: memref<64x32xf32, #tpu.memory_space<vmem>>, %arg15: memref<1x32xf32, #tpu.memory_space<vmem>>, %arg16: memref<1x32xf32, #tpu.memory_space<vmem>>, %arg17: memref<1x32xf32, #tpu.memory_space<vmem>>, %arg18: memref<2x32xf32, #tpu.memory_space<vmem>>) attributes {dimension_semantics = [#tpu.dimension_semantics<parallel>], iteration_bounds = array<i64: 1>, scalar_prefetch = 1 : i64, scratch_operands = 0 : i64, tpu.core_type = #tpu.core_type<tc>, window_params = [{transform_indices = @transform_0, window_bounds = array<i64: 2, 8, 32>}, {pipeline_mode = #tpu.pipeline_mode<synchronous>, transform_indices = @transform_1, window_bounds = array<i64: 32, 32>}, {pipeline_mode = #tpu.pipeline_mode<synchronous>, transform_indices = @transform_2, window_bounds = array<i64: 32, 32>}, {pipeline_mode = #tpu.pipeline_mode<synchronous>, transform_indices = @transform_3, window_bounds = array<i64: 32, 32>}, {pipeline_mode = #tpu.pipeline_mode<synchronous>, transform_indices = @transform_4, window_bounds = array<i64: 32, 4>}, {pipeline_mode = #tpu.pipeline_mode<synchronous>, transform_indices = @transform_5, window_bounds = array<i64: 4, 32>}, {pipeline_mode = #tpu.pipeline_mode<synchronous>, transform_indices = @transform_6, window_bounds = array<i64: 32, 32>}, {pipeline_mode = #tpu.pipeline_mode<synchronous>, transform_indices = @transform_7, window_bounds = array<i64: 1, 32>}, {pipeline_mode = #tpu.pipeline_mode<synchronous>, transform_indices = @transform_8, window_bounds = array<i64: 1, 32>}, {pipeline_mode = #tpu.pipeline_mode<synchronous>, transform_indices = @transform_9, window_bounds = array<i64: 1, 32>}, {pipeline_mode = #tpu.pipeline_mode<synchronous>, transform_indices = @transform_10, window_bounds = array<i64: 32, 64>}, {pipeline_mode = #tpu.pipeline_mode<synchronous>, transform_indices = @transform_11, window_bounds = array<i64: 1, 64>}, {pipeline_mode = #tpu.pipeline_mode<synchronous>, transform_indices = @transform_12, window_bounds = array<i64: 64, 32>}, {pipeline_mode = #tpu.pipeline_mode<synchronous>, transform_indices = @transform_13, window_bounds = array<i64: 1, 32>}, {pipeline_mode = #tpu.pipeline_mode<synchronous>, transform_indices = @transform_14, window_bounds = array<i64: 1, 32>}, {pipeline_mode = #tpu.pipeline_mode<synchronous>, transform_indices = @transform_15, window_bounds = array<i64: 1, 32>}, {transform_indices = @transform_16, window_bounds = array<i64: 2, 32>}]} {
    %c0 = arith.constant 0 : index
    %0 = memref.load %arg1[%c0] : memref<1xi32, #tpu.memory_space<smem>>
    %c0_0 = arith.constant 0 : index
    %c0_1 = arith.constant 0 : index
    %c0_2 = arith.constant 0 : index
    %1 = vector.load %arg2[%c0_0, %c0_1, %c0_2] : memref<2x8x32xf32, #tpu.memory_space<vmem>>, vector<2x8x32xf32>
    %2 = vector.shape_cast %1 : vector<2x8x32xf32> to vector<16x32xf32>
    %c0_3 = arith.constant 0 : index
    %3 = arith.index_cast %0 : i32 to index
    %c0_4 = arith.constant 0 : index
    %4 = vector.load %arg2[%c0_3, %3, %c0_4] : memref<2x8x32xf32, #tpu.memory_space<vmem>>, vector<2x1x32xf32>
    %5 = vector.shape_cast %4 : vector<2x1x32xf32> to vector<2x32xf32>
    %c0_5 = arith.constant 0 : index
    %c0_6 = arith.constant 0 : index
    %6 = vector.load %arg3[%c0_5, %c0_6] : memref<32x32xf32, #tpu.memory_space<vmem>>, vector<32x32xf32>
    %cst = arith.constant dense<0.000000e+00> : vector<2x32xf32>
    %7 = tpu.matmul %5, %6, %cst {dimension_numbers = #tpu.dot_dimension_numbers<[1], [0], [0], [1], [0, 0, 1, 1], [], []>} : vector<2x32xf32>, vector<32x32xf32>, vector<2x32xf32> -> vector<2x32xf32>
    %c0_7 = arith.constant 0 : index
    %c0_8 = arith.constant 0 : index
    %8 = vector.load %arg4[%c0_7, %c0_8] : memref<32x32xf32, #tpu.memory_space<vmem>>, vector<32x32xf32>
    %cst_9 = arith.constant dense<0.000000e+00> : vector<16x32xf32>
    %9 = tpu.matmul %2, %8, %cst_9 {dimension_numbers = #tpu.dot_dimension_numbers<[1], [0], [0], [1], [0, 0, 1, 1], [], []>} : vector<16x32xf32>, vector<32x32xf32>, vector<16x32xf32> -> vector<16x32xf32>
    %c0_10 = arith.constant 0 : index
    %c0_11 = arith.constant 0 : index
    %10 = vector.load %arg5[%c0_10, %c0_11] : memref<32x32xf32, #tpu.memory_space<vmem>>, vector<32x32xf32>
    %cst_12 = arith.constant dense<0.000000e+00> : vector<16x32xf32>
    %11 = tpu.matmul %2, %10, %cst_12 {dimension_numbers = #tpu.dot_dimension_numbers<[1], [0], [0], [1], [0, 0, 1, 1], [], []>} : vector<16x32xf32>, vector<32x32xf32>, vector<16x32xf32> -> vector<16x32xf32>
    %12 = vector.shape_cast %7 : vector<2x32xf32> to vector<2x1x32xf32>
    %13 = vector.shape_cast %9 : vector<16x32xf32> to vector<2x8x32xf32>
    %14 = vector.broadcast %12 : vector<2x1x32xf32> to vector<2x8x32xf32>
    %15 = arith.mulf %14, %13 : vector<2x8x32xf32>
    %16 = vector.shape_cast %15 : vector<2x8x32xf32> to vector<16x32xf32>
    %c0_13 = arith.constant 0 : index
    %c0_14 = arith.constant 0 : index
    %17 = vector.load %arg6[%c0_13, %c0_14] : memref<32x4xf32, #tpu.memory_space<vmem>>, vector<32x4xf32>
    %cst_15 = arith.constant dense<0.000000e+00> : vector<16x4xf32>
    %18 = tpu.matmul %16, %17, %cst_15 {dimension_numbers = #tpu.dot_dimension_numbers<[1], [0], [0], [1], [0, 0, 1, 1], [], []>} : vector<16x32xf32>, vector<32x4xf32>, vector<16x4xf32> -> vector<16x4xf32>
    %19 = vector.shape_cast %18 : vector<16x4xf32> to vector<2x8x4xf32>
    %20 = tpu.iota {dimensions = array<i32: 1>} : vector<2x8x1xi32>
    %21 = vector.broadcast %0 : i32 to vector<2x8x1xi32>
    %22 = arith.cmpi sle, %20, %21 : vector<2x8x1xi32>
    %cst_16 = arith.constant -1.70141173E+38 : f32
    %23 = vector.shape_cast %22 : vector<2x8x1xi1> to vector<2x8x1xi1>
    %24 = vector.broadcast %23 : vector<2x8x1xi1> to vector<2x8x4xi1>
    %25 = vector.broadcast %cst_16 : f32 to vector<2x8x4xf32>
    %26 = arith.select %24, %19, %25 : vector<2x8x4xi1>, vector<2x8x4xf32>
    %cst_17 = arith.constant dense<0xFF800000> : vector<2x4xf32>
    %27 = vector.multi_reduction <maximumf>, %26, %cst_17 [1] : vector<2x8x4xf32> to vector<2x4xf32>
    %28 = vector.shape_cast %27 : vector<2x4xf32> to vector<2x1x4xf32>
    %29 = vector.broadcast %28 : vector<2x1x4xf32> to vector<2x8x4xf32>
    %30 = arith.subf %26, %29 : vector<2x8x4xf32>
    %31 = math.exp %30 : vector<2x8x4xf32>
    %cst_18 = arith.constant dense<0.000000e+00> : vector<2x4xf32>
    %32 = vector.multi_reduction <add>, %31, %cst_18 [1] : vector<2x8x4xf32> to vector<2x4xf32>
    %33 = vector.shape_cast %32 : vector<2x4xf32> to vector<2x1x4xf32>
    %34 = tpu.reciprocal %33 {approx = true} : vector<2x1x4xf32> -> vector<2x1x4xf32>
    %35 = vector.broadcast %34 : vector<2x1x4xf32> to vector<2x8x4xf32>
    %36 = arith.mulf %31, %35 : vector<2x8x4xf32>
    %37 = vector.shape_cast %36 : vector<2x8x4xf32> to vector<16x4xf32>
    %c0_19 = arith.constant 0 : index
    %c0_20 = arith.constant 0 : index
    %38 = vector.load %arg7[%c0_19, %c0_20] : memref<4x32xf32, #tpu.memory_space<vmem>>, vector<4x32xf32>
    %cst_21 = arith.constant dense<0.000000e+00> : vector<16x32xf32>
    %39 = tpu.matmul %37, %38, %cst_21 {dimension_numbers = #tpu.dot_dimension_numbers<[1], [0], [0], [1], [0, 0, 1, 1], [], []>} : vector<16x4xf32>, vector<4x32xf32>, vector<16x32xf32> -> vector<16x32xf32>
    %40 = vector.shape_cast %39 : vector<16x32xf32> to vector<2x8x32xf32>
    %41 = vector.shape_cast %11 : vector<16x32xf32> to vector<2x8x32xf32>
    %42 = arith.mulf %40, %41 : vector<2x8x32xf32>
    %cst_22 = arith.constant dense<0.000000e+00> : vector<2x32xf32>
    %43 = vector.multi_reduction <add>, %42, %cst_22 [1] : vector<2x8x32xf32> to vector<2x32xf32>
    %c0_23 = arith.constant 0 : index
    %c0_24 = arith.constant 0 : index
    %44 = vector.load %arg8[%c0_23, %c0_24] : memref<32x32xf32, #tpu.memory_space<vmem>>, vector<32x32xf32>
    %cst_25 = arith.constant dense<0.000000e+00> : vector<2x32xf32>
    %45 = tpu.matmul %43, %44, %cst_25 {dimension_numbers = #tpu.dot_dimension_numbers<[1], [0], [0], [1], [0, 0, 1, 1], [], []>} : vector<2x32xf32>, vector<32x32xf32>, vector<2x32xf32> -> vector<2x32xf32>
    %c0_26 = arith.constant 0 : index
    %c0_27 = arith.constant 0 : index
    %46 = vector.load %arg9[%c0_26, %c0_27] : memref<1x32xf32, #tpu.memory_space<vmem>>, vector<1x32xf32>
    %47 = vector.broadcast %46 : vector<1x32xf32> to vector<2x32xf32>
    %48 = arith.addf %45, %47 : vector<2x32xf32>
    %cst_28 = arith.constant dense<0.000000e+00> : vector<2xf32>
    %49 = vector.multi_reduction <add>, %48, %cst_28 [1] : vector<2x32xf32> to vector<2xf32>
    %50 = vector.shape_cast %49 : vector<2xf32> to vector<2x1xf32>
    %cst_29 = arith.constant 3.200000e+01 : f32
    %51 = vector.broadcast %cst_29 : f32 to vector<2x1xf32>
    %52 = arith.divf %50, %51 : vector<2x1xf32>
    %53 = vector.broadcast %52 : vector<2x1xf32> to vector<2x32xf32>
    %54 = arith.subf %48, %53 : vector<2x32xf32>
    %55 = arith.mulf %54, %54 : vector<2x32xf32>
    %cst_30 = arith.constant dense<0.000000e+00> : vector<2xf32>
    %56 = vector.multi_reduction <add>, %55, %cst_30 [1] : vector<2x32xf32> to vector<2xf32>
    %57 = vector.shape_cast %56 : vector<2xf32> to vector<2x1xf32>
    %cst_31 = arith.constant 3.200000e+01 : f32
    %58 = vector.broadcast %cst_31 : f32 to vector<2x1xf32>
    %59 = arith.divf %57, %58 : vector<2x1xf32>
    %60 = vector.broadcast %52 : vector<2x1xf32> to vector<2x32xf32>
    %61 = arith.subf %48, %60 : vector<2x32xf32>
    %cst_32 = arith.constant 9.99999974E-6 : f32
    %62 = vector.broadcast %cst_32 : f32 to vector<2x1xf32>
    %63 = arith.addf %59, %62 : vector<2x1xf32>
    %64 = math.rsqrt %63 : vector<2x1xf32>
    %65 = vector.broadcast %64 : vector<2x1xf32> to vector<2x32xf32>
    %66 = arith.mulf %61, %65 : vector<2x32xf32>
    %c0_33 = arith.constant 0 : index
    %c0_34 = arith.constant 0 : index
    %67 = vector.load %arg10[%c0_33, %c0_34] : memref<1x32xf32, #tpu.memory_space<vmem>>, vector<1x32xf32>
    %68 = vector.broadcast %67 : vector<1x32xf32> to vector<2x32xf32>
    %69 = arith.mulf %66, %68 : vector<2x32xf32>
    %c0_35 = arith.constant 0 : index
    %c0_36 = arith.constant 0 : index
    %70 = vector.load %arg11[%c0_35, %c0_36] : memref<1x32xf32, #tpu.memory_space<vmem>>, vector<1x32xf32>
    %71 = vector.broadcast %70 : vector<1x32xf32> to vector<2x32xf32>
    %72 = arith.addf %69, %71 : vector<2x32xf32>
    %c0_37 = arith.constant 0 : index
    %c0_38 = arith.constant 0 : index
    %73 = vector.load %arg12[%c0_37, %c0_38] : memref<32x64xf32, #tpu.memory_space<vmem>>, vector<32x64xf32>
    %cst_39 = arith.constant dense<0.000000e+00> : vector<2x64xf32>
    %74 = tpu.matmul %72, %73, %cst_39 {dimension_numbers = #tpu.dot_dimension_numbers<[1], [0], [0], [1], [0, 0, 1, 1], [], []>} : vector<2x32xf32>, vector<32x64xf32>, vector<2x64xf32> -> vector<2x64xf32>
    %c0_40 = arith.constant 0 : index
    %c0_41 = arith.constant 0 : index
    %75 = vector.load %arg13[%c0_40, %c0_41] : memref<1x64xf32, #tpu.memory_space<vmem>>, vector<1x64xf32>
    %76 = vector.broadcast %75 : vector<1x64xf32> to vector<2x64xf32>
    %77 = arith.addf %74, %76 : vector<2x64xf32>
    %cst_42 = arith.constant 0.000000e+00 : f32
    %78 = vector.broadcast %cst_42 : f32 to vector<2x64xf32>
    %79 = arith.maximumf %77, %78 : vector<2x64xf32>
    %c0_43 = arith.constant 0 : index
    %c0_44 = arith.constant 0 : index
    %80 = vector.load %arg14[%c0_43, %c0_44] : memref<64x32xf32, #tpu.memory_space<vmem>>, vector<64x32xf32>
    %cst_45 = arith.constant dense<0.000000e+00> : vector<2x32xf32>
    %81 = tpu.matmul %79, %80, %cst_45 {dimension_numbers = #tpu.dot_dimension_numbers<[1], [0], [0], [1], [0, 0, 1, 1], [], []>} : vector<2x64xf32>, vector<64x32xf32>, vector<2x32xf32> -> vector<2x32xf32>
    %c0_46 = arith.constant 0 : index
    %c0_47 = arith.constant 0 : index
    %82 = vector.load %arg15[%c0_46, %c0_47] : memref<1x32xf32, #tpu.memory_space<vmem>>, vector<1x32xf32>
    %83 = vector.broadcast %82 : vector<1x32xf32> to vector<2x32xf32>
    %84 = arith.addf %81, %83 : vector<2x32xf32>
    %cst_48 = arith.constant dense<0.000000e+00> : vector<2xf32>
    %85 = vector.multi_reduction <add>, %84, %cst_48 [1] : vector<2x32xf32> to vector<2xf32>
    %86 = vector.shape_cast %85 : vector<2xf32> to vector<2x1xf32>
    %cst_49 = arith.constant 3.200000e+01 : f32
    %87 = vector.broadcast %cst_49 : f32 to vector<2x1xf32>
    %88 = arith.divf %86, %87 : vector<2x1xf32>
    %89 = vector.broadcast %88 : vector<2x1xf32> to vector<2x32xf32>
    %90 = arith.subf %84, %89 : vector<2x32xf32>
    %91 = arith.mulf %90, %90 : vector<2x32xf32>
    %cst_50 = arith.constant dense<0.000000e+00> : vector<2xf32>
    %92 = vector.multi_reduction <add>, %91, %cst_50 [1] : vector<2x32xf32> to vector<2xf32>
    %93 = vector.shape_cast %92 : vector<2xf32> to vector<2x1xf32>
    %cst_51 = arith.constant 3.200000e+01 : f32
    %94 = vector.broadcast %cst_51 : f32 to vector<2x1xf32>
    %95 = arith.divf %93, %94 : vector<2x1xf32>
    %96 = vector.broadcast %88 : vector<2x1xf32> to vector<2x32xf32>
    %97 = arith.subf %84, %96 : vector<2x32xf32>
    %cst_52 = arith.constant 9.99999974E-6 : f32
    %98 = vector.broadcast %cst_52 : f32 to vector<2x1xf32>
    %99 = arith.addf %95, %98 : vector<2x1xf32>
    %100 = math.rsqrt %99 : vector<2x1xf32>
    %101 = vector.broadcast %100 : vector<2x1xf32> to vector<2x32xf32>
    %102 = arith.mulf %97, %101 : vector<2x32xf32>
    %c0_53 = arith.constant 0 : index
    %c0_54 = arith.constant 0 : index
    %103 = vector.load %arg16[%c0_53, %c0_54] : memref<1x32xf32, #tpu.memory_space<vmem>>, vector<1x32xf32>
    %104 = vector.broadcast %103 : vector<1x32xf32> to vector<2x32xf32>
    %105 = arith.mulf %102, %104 : vector<2x32xf32>
    %c0_55 = arith.constant 0 : index
    %c0_56 = arith.constant 0 : index
    %106 = vector.load %arg17[%c0_55, %c0_56] : memref<1x32xf32, #tpu.memory_space<vmem>>, vector<1x32xf32>
    %107 = vector.broadcast %106 : vector<1x32xf32> to vector<2x32xf32>
    %108 = arith.addf %105, %107 : vector<2x32xf32>
    %c0_57 = arith.constant 0 : index
    %c0_58 = arith.constant 0 : index
    %109 = vector.load %arg18[%c0_57, %c0_58] : memref<2x32xf32, #tpu.memory_space<vmem>>, vector<2x32xf32>
    tpu.vector_store %arg18[%c0_57, %c0_58], %108 {strides = array<i32>} : memref<2x32xf32, #tpu.memory_space<vmem>>, vector<2x32xf32>,
    return
  }
  func.func @transform_0(%arg0: i32, %arg1: memref<1xi32, #tpu.memory_space<smem>>) -> (i32, i32, i32) {
    %c0_i32 = arith.constant 0 : i32
    %c0_i32_0 = arith.constant 0 : i32
    %c0_i32_1 = arith.constant 0 : i32
    return %arg0, %c0_i32, %c0_i32_0 : i32, i32, i32
  }
  func.func @transform_1(%arg0: i32, %arg1: memref<1xi32, #tpu.memory_space<smem>>) -> (i32, i32) {
    %c0_i32 = arith.constant 0 : i32
    %c0_i32_0 = arith.constant 0 : i32
    %c0_i32_1 = arith.constant 0 : i32
    return %c0_i32, %c0_i32_0 : i32, i32
  }
  func.func @transform_2(%arg0: i32, %arg1: memref<1xi32, #tpu.memory_space<smem>>) -> (i32, i32) {
    %c0_i32 = arith.constant 0 : i32
    %c0_i32_0 = arith.constant 0 : i32
    %c0_i32_1 = arith.constant 0 : i32
    return %c0_i32, %c0_i32_0 : i32, i32
  }
  func.func @transform_3(%arg0: i32, %arg1: memref<1xi32, #tpu.memory_space<smem>>) -> (i32, i32) {
    %c0_i32 = arith.constant 0 : i32
    %c0_i32_0 = arith.constant 0 : i32
    %c0_i32_1 = arith.constant 0 : i32
    return %c0_i32, %c0_i32_0 : i32, i32
  }
  func.func @transform_4(%arg0: i32, %arg1: memref<1xi32, #tpu.memory_space<smem>>) -> (i32, i32) {
    %c0_i32 = arith.constant 0 : i32
    %c0_i32_0 = arith.constant 0 : i32
    %c0_i32_1 = arith.constant 0 : i32
    return %c0_i32, %c0_i32_0 : i32, i32
  }
  func.func @transform_5(%arg0: i32, %arg1: memref<1xi32, #tpu.memory_space<smem>>) -> (i32, i32) {
    %c0_i32 = arith.constant 0 : i32
    %c0_i32_0 = arith.constant 0 : i32
    %c0_i32_1 = arith.constant 0 : i32
    return %c0_i32, %c0_i32_0 : i32, i32
  }
  func.func @transform_6(%arg0: i32, %arg1: memref<1xi32, #tpu.memory_space<smem>>) -> (i32, i32) {
    %c0_i32 = arith.constant 0 : i32
    %c0_i32_0 = arith.constant 0 : i32
    %c0_i32_1 = arith.constant 0 : i32
    return %c0_i32, %c0_i32_0 : i32, i32
  }
  func.func @transform_7(%arg0: i32, %arg1: memref<1xi32, #tpu.memory_space<smem>>) -> (i32, i32) {
    %c0_i32 = arith.constant 0 : i32
    %c0_i32_0 = arith.constant 0 : i32
    %c0_i32_1 = arith.constant 0 : i32
    return %c0_i32, %c0_i32_0 : i32, i32
  }
  func.func @transform_8(%arg0: i32, %arg1: memref<1xi32, #tpu.memory_space<smem>>) -> (i32, i32) {
    %c0_i32 = arith.constant 0 : i32
    %c0_i32_0 = arith.constant 0 : i32
    %c0_i32_1 = arith.constant 0 : i32
    return %c0_i32, %c0_i32_0 : i32, i32
  }
  func.func @transform_9(%arg0: i32, %arg1: memref<1xi32, #tpu.memory_space<smem>>) -> (i32, i32) {
    %c0_i32 = arith.constant 0 : i32
    %c0_i32_0 = arith.constant 0 : i32
    %c0_i32_1 = arith.constant 0 : i32
    return %c0_i32, %c0_i32_0 : i32, i32
  }
  func.func @transform_10(%arg0: i32, %arg1: memref<1xi32, #tpu.memory_space<smem>>) -> (i32, i32) {
    %c0_i32 = arith.constant 0 : i32
    %c0_i32_0 = arith.constant 0 : i32
    %c0_i32_1 = arith.constant 0 : i32
    return %c0_i32, %c0_i32_0 : i32, i32
  }
  func.func @transform_11(%arg0: i32, %arg1: memref<1xi32, #tpu.memory_space<smem>>) -> (i32, i32) {
    %c0_i32 = arith.constant 0 : i32
    %c0_i32_0 = arith.constant 0 : i32
    %c0_i32_1 = arith.constant 0 : i32
    return %c0_i32, %c0_i32_0 : i32, i32
  }
  func.func @transform_12(%arg0: i32, %arg1: memref<1xi32, #tpu.memory_space<smem>>) -> (i32, i32) {
    %c0_i32 = arith.constant 0 : i32
    %c0_i32_0 = arith.constant 0 : i32
    %c0_i32_1 = arith.constant 0 : i32
    return %c0_i32, %c0_i32_0 : i32, i32
  }
  func.func @transform_13(%arg0: i32, %arg1: memref<1xi32, #tpu.memory_space<smem>>) -> (i32, i32) {
    %c0_i32 = arith.constant 0 : i32
    %c0_i32_0 = arith.constant 0 : i32
    %c0_i32_1 = arith.constant 0 : i32
    return %c0_i32, %c0_i32_0 : i32, i32
  }
  func.func @transform_14(%arg0: i32, %arg1: memref<1xi32, #tpu.memory_space<smem>>) -> (i32, i32) {
    %c0_i32 = arith.constant 0 : i32
    %c0_i32_0 = arith.constant 0 : i32
    %c0_i32_1 = arith.constant 0 : i32
    return %c0_i32, %c0_i32_0 : i32, i32
  }
  func.func @transform_15(%arg0: i32, %arg1: memref<1xi32, #tpu.memory_space<smem>>) -> (i32, i32) {
    %c0_i32 = arith.constant 0 : i32
    %c0_i32_0 = arith.constant 0 : i32
    %c0_i32_1 = arith.constant 0 : i32
    return %c0_i32, %c0_i32_0 : i32, i32
  }
  func.func @transform_16(%arg0: i32, %arg1: memref<1xi32, #tpu.memory_space<smem>>) -> (i32, i32) {
    %c0_i32 = arith.constant 0 : i32
    %c0_i32_0 = arith.constant 0 : i32
    return %arg0, %c0_i32 : i32, i32
  }
}

</mosaic_0001>

<llo_original>
// kernel: tpu_custom_call.1
$region0: #{tpu_custom_call.1}
  #allocation0 [shape = 'u32[]', space=smem, size = 0x4, offset = 0x4, fixed_abs, tag = 'smem constant byte address 0x4 - core index']
  #allocation1 [shape = 'u32[144,128]{1,0:T(1,128)}', space=vmem, size = 0x12000, scoped, tag = 'internal scratch']
  #allocation2 [shape = 's32[1]{0}', space=sflag, size = 0x4, scoped, tag = 'scoped memory for tpu_custom_call.1']
  #allocation3 [shape = 's32[1]{0:T(128)S(6)}', space=smem, size = 0x200, scoped, tag = 'prefetched SMEM operand 0']
  %s0 = inlined_call_operand.<no memory space> [shape: s32[1], index: 0, kind: input, shape index: {}]
  %s1 = inlined_call_operand.hbm [shape: f32[2,8,32], index: 1, kind: input, shape index: {}]
  %s2 = inlined_call_operand.vmem [shape: f32[32,32], index: 2, kind: input, shape index: {}]
  %s3 = inlined_call_operand.vmem [shape: f32[32,32], index: 3, kind: input, shape index: {}]
  %s4 = inlined_call_operand.vmem [shape: f32[32,32], index: 4, kind: input, shape index: {}]
  %s5 = inlined_call_operand.vmem [shape: f32[32,4], index: 5, kind: input, shape index: {}]
  %s6 = inlined_call_operand.hbm [shape: f32[4,32], index: 6, kind: input, shape index: {}]
  %s7 = inlined_call_operand.hbm [shape: f32[32,32], index: 7, kind: input, shape index: {}]
  %s8 = inlined_call_operand.vmem [shape: f32[1,32], index: 8, kind: input, shape index: {}]
  %s9 = inlined_call_operand.vmem [shape: f32[1,32], index: 9, kind: input, shape index: {}]
  %s10 = inlined_call_operand.vmem [shape: f32[1,32], index: 10, kind: input, shape index: {}]
  %s11 = inlined_call_operand.vmem [shape: f32[32,64], index: 11, kind: input, shape index: {}]
  %s12 = inlined_call_operand.vmem [shape: f32[1,64], index: 12, kind: input, shape index: {}]
  %s13 = inlined_call_operand.vmem [shape: f32[64,32], index: 13, kind: input, shape index: {}]
  %s14 = inlined_call_operand.vmem [shape: f32[1,32], index: 14, kind: input, shape index: {}]
  %s15 = inlined_call_operand.vmem [shape: f32[1,32], index: 15, kind: input, shape index: {}]
  %s16 = inlined_call_operand.vmem [shape: f32[1,32], index: 16, kind: input, shape index: {}]
  %s17 = inlined_call_operand.hbm [shape: f32[2,32], index: 17, kind: output, shape index: {}]
  %s18 = sld [smem:[#allocation0]]
  $region86: #{tpu_custom_call.1} parent=0
    _
  %s20 = ssub.s32 1, %s18
  %s21 = scalar_select 0, %s20, %s18
  %22 = sst [smem:[#allocation3]] %s0
  $region1: #{tpu_custom_call.1} parent=0
    #allocation4 [shape = 'u8[8192]{0}', space=vmem, size = 0x2000, scoped, tag = 'input window, operand 1, single buffered']
    #allocation5 [shape = 's32[1]{0}', space=sflag, size = 0x4, scoped, tag = 'scoped memory for tpu_custom_call.1']
    #allocation6 [shape = 's32[1]{0}', space=sflag, size = 0x4, scoped, tag = 'scoped memory for tpu_custom_call.1']
    #allocation7 [shape = 'u8[2048]{0}', space=vmem, size = 0x800, scoped, tag = 'input window, operand 6, single buffered']
    #allocation8 [shape = 's32[1]{0}', space=sflag, size = 0x4, scoped, tag = 'scoped memory for tpu_custom_call.1']
    #allocation9 [shape = 'u8[16384]{0}', space=vmem, size = 0x4000, scoped, tag = 'input window, operand 7, single buffered']
    #allocation10 [shape = 'u8[1024]{0}', space=vmem, size = 0x400, scoped, tag = 'output window, operand 0, single buffered']
    %23 = vsyncpa [#allocation5], 0
    %24 = vsyncpa [#allocation8], 0
    %25 = vsyncpa [#allocation6], 0
    // Predicated region
    $region2: #{tpu_custom_call.1} parent=1 // pred_check
      _
    $region3: #{tpu_custom_call.1} parent=1 // pred_check_branch
      %27 = sbr.rel (0) target = $region5
    $region4: #{tpu_custom_call.1} parent=1 // pred_region
      %s29 = ssub.s32 256, 256
      %30 = vsyncadd [#allocation5], %s29
      %s31 = sshll.u32 [#allocation4], 4
      %s32 = int_to_ptr.vmem [resolvable:$true] %s31
      %37 = dma.hbm_to_vmem [thread:$0]  %s1, 256, %s32, [#allocation5], 128, 128, 8
    $region5: #{tpu_custom_call.1} parent=1 // pred_fallthru
      _
    // Predicated region
    $region6: #{tpu_custom_call.1} parent=1 // pred_check
      _
    $region7: #{tpu_custom_call.1} parent=1 // pred_check_branch
      %39 = sbr.rel (0) target = $region9
    $region8: #{tpu_custom_call.1} parent=1 // pred_region
      _
    $region9: #{tpu_custom_call.1} parent=1 // pred_fallthru
      _
    // Predicated region
    $region10: #{tpu_custom_call.1} parent=1 // pred_check
      _
    $region11: #{tpu_custom_call.1} parent=1 // pred_check_branch
      %41 = sbr.rel (0) target = $region13
    $region12: #{tpu_custom_call.1} parent=1 // pred_region
      _
    $region13: #{tpu_custom_call.1} parent=1 // pred_fallthru
      _
    // Predicated region
    $region14: #{tpu_custom_call.1} parent=1 // pred_check
      _
    $region15: #{tpu_custom_call.1} parent=1 // pred_check_branch
      %43 = sbr.rel (0) target = $region17
    $region16: #{tpu_custom_call.1} parent=1 // pred_region
      _
    $region17: #{tpu_custom_call.1} parent=1 // pred_fallthru
      _
    // Predicated region
    $region18: #{tpu_custom_call.1} parent=1 // pred_check
      _
    $region19: #{tpu_custom_call.1} parent=1 // pred_check_branch
      %45 = sbr.rel (0) target = $region21
    $region20: #{tpu_custom_call.1} parent=1 // pred_region
      _
    $region21: #{tpu_custom_call.1} parent=1 // pred_fallthru
      _
    // Predicated region
    $region22: #{tpu_custom_call.1} parent=1 // pred_check
      _
    $region23: #{tpu_custom_call.1} parent=1 // pred_check_branch
      %47 = sbr.rel (0) target = $region25
    $region24: #{tpu_custom_call.1} parent=1 // pred_region
      %s49 = ssub.s32 64, 64
      %50 = vsyncadd [#allocation8], %s49
      %s52 = sshll.u32 [#allocation7], 4
      %s53 = int_to_ptr.vmem [resolvable:$true] %s52
      %55 = dma.hbm_to_vmem [thread:$0]  %s6, 64, %s53, [#allocation8]
    $region25: #{tpu_custom_call.1} parent=1 // pred_fallthru
      _
    // Predicated region
    $region26: #{tpu_custom_call.1} parent=1 // pred_check
      _
    $region27: #{tpu_custom_call.1} parent=1 // pred_check_branch
      %57 = sbr.rel (0) target = $region29
    $region28: #{tpu_custom_call.1} parent=1 // pred_region
      %s59 = ssub.s32 512, 512
      %60 = vsyncadd [#allocation8], %s59
      %s61 = sshll.u32 [#allocation9], 4
      %s62 = int_to_ptr.vmem [resolvable:$true] %s61
      %67 = dma.hbm_to_vmem [thread:$0]  %s7, 512, %s62, [#allocation8], 128, 128, 8
    $region29: #{tpu_custom_call.1} parent=1 // pred_fallthru
      _
    // Predicated region
    $region30: #{tpu_custom_call.1} parent=1 // pred_check
      _
    $region31: #{tpu_custom_call.1} parent=1 // pred_check_branch
      %69 = sbr.rel (0) target = $region33
    $region32: #{tpu_custom_call.1} parent=1 // pred_region
      _
    $region33: #{tpu_custom_call.1} parent=1 // pred_fallthru
      _
    // Predicated region
    $region34: #{tpu_custom_call.1} parent=1 // pred_check
      _
    $region35: #{tpu_custom_call.1} parent=1 // pred_check_branch
      %71 = sbr.rel (0) target = $region37
    $region36: #{tpu_custom_call.1} parent=1 // pred_region
      _
    $region37: #{tpu_custom_call.1} parent=1 // pred_fallthru
      _
    // Predicated region
    $region38: #{tpu_custom_call.1} parent=1 // pred_check
      _
    $region39: #{tpu_custom_call.1} parent=1 // pred_check_branch
      %73 = sbr.rel (0) target = $region41
    $region40: #{tpu_custom_call.1} parent=1 // pred_region
      _
    $region41: #{tpu_custom_call.1} parent=1 // pred_fallthru
      _
    // Predicated region
    $region42: #{tpu_custom_call.1} parent=1 // pred_check
      _
    $region43: #{tpu_custom_call.1} parent=1 // pred_check_branch
      %75 = sbr.rel (0) target = $region45
    $region44: #{tpu_custom_call.1} parent=1 // pred_region
      _
    $region45: #{tpu_custom_call.1} parent=1 // pred_fallthru
      _
    // Predicated region
    $region46: #{tpu_custom_call.1} parent=1 // pred_check
      _
    $region47: #{tpu_custom_call.1} parent=1 // pred_check_branch
      %77 = sbr.rel (0) target = $region49
    $region48: #{tpu_custom_call.1} parent=1 // pred_region
      _
    $region49: #{tpu_custom_call.1} parent=1 // pred_fallthru
      _
    // Predicated region
    $region50: #{tpu_custom_call.1} parent=1 // pred_check
      _
    $region51: #{tpu_custom_call.1} parent=1 // pred_check_branch
      %79 = sbr.rel (0) target = $region53
    $region52: #{tpu_custom_call.1} parent=1 // pred_region
      _
    $region53: #{tpu_custom_call.1} parent=1 // pred_fallthru
      _
    // Predicated region
    $region54: #{tpu_custom_call.1} parent=1 // pred_check
      _
    $region55: #{tpu_custom_call.1} parent=1 // pred_check_branch
      %81 = sbr.rel (0) target = $region57
    $region56: #{tpu_custom_call.1} parent=1 // pred_region
      _
    $region57: #{tpu_custom_call.1} parent=1 // pred_fallthru
      _
    // Predicated region
    $region58: #{tpu_custom_call.1} parent=1 // pred_check
      _
    $region59: #{tpu_custom_call.1} parent=1 // pred_check_branch
      %83 = sbr.rel (0) target = $region61
    $region60: #{tpu_custom_call.1} parent=1 // pred_region
      _
    $region61: #{tpu_custom_call.1} parent=1 // pred_fallthru
      _
    // Predicated region
    $region62: #{tpu_custom_call.1} parent=1 // pred_check
      _
    $region63: #{tpu_custom_call.1} parent=1 // pred_check_branch
      %85 = sbr.rel (0) target = $region65
    $region64: #{tpu_custom_call.1} parent=1 // pred_region
      _
    $region65: #{tpu_custom_call.1} parent=1 // pred_fallthru
      _
    // Predicated region
    $region66: #{tpu_custom_call.1} parent=1 // pred_check
      _
    $region67: #{tpu_custom_call.1} parent=1 // pred_check_branch
      %87 = sbr.rel (0) target = $region69
    $region68: #{tpu_custom_call.1} parent=1 // pred_region
      %88 = dma.done [#allocation5], 256
    $region69: #{tpu_custom_call.1} parent=1 // pred_fallthru
      _
    // Predicated region
    $region70: #{tpu_custom_call.1} parent=1 // pred_check
      _
    $region71: #{tpu_custom_call.1} parent=1 // pred_check_branch
      %90 = sbr.rel (0) target = $region73
    $region72: #{tpu_custom_call.1} parent=1 // pred_region
      %91 = dma.done [#allocation8], 64
    $region73: #{tpu_custom_call.1} parent=1 // pred_fallthru
      _
    // Predicated region
    $region74: #{tpu_custom_call.1} parent=1 // pred_check
      _
    $region75: #{tpu_custom_call.1} parent=1 // pred_check_branch
      %93 = sbr.rel (0) target = $region77
    $region76: #{tpu_custom_call.1} parent=1 // pred_region
      %94 = dma.done [#allocation8], 512
    $region77: #{tpu_custom_call.1} parent=1 // pred_fallthru
      _
    %s95 = sld [smem:[#allocation3]]
    %v96 = vld [vmem:[#allocation4] sm:$0xff]
    %v97 = vld [vmem:[#allocation4 + $0x8] sm:$0xff]
    %s98 = scalar_lea.vmem [#allocation4], %s95
    %v99 = vld [vmem:[%s98] sm:$0x1]
    %v100 = vld [vmem:[%s98 + $0x8] sm:$0x1]
    %v101 = vld [vmem:[%s2] sm:$0xff]
    %v102 = vld [vmem:[%s2 + $0x8] sm:$0xff]
    %v103 = vld [vmem:[%s2 + $0x10] sm:$0xff]
    %v104 = vld [vmem:[%s2 + $0x18] sm:$0xff]
    %v107 = vrot.slane %v100, 7
    %vm108 = vcmask 1041409
    %v109 = vsel %vm108, %v107, %v99
    %vm110 = vcmask 261120
    %v111 = vsel %vm110, %v109, 0
    %113 = vmatprep.subr.mxu0 0.0
    %114 = vmatpush1.msra.mxu0 %v101
    %115 = vmatprep.subr.mxu0 0.0
    %116 = vmatpush1.msra.mxu0 %v102
    %117 = vmatprep.subr.mxu0 0.0
    %118 = vmatpush1.msra.mxu0 %v103
    %119 = vmatprep.subr.mxu0 0.0
    %120 = vmatpush1.msra.mxu0 %v104
    %121 = vmatprep.subr.mxu0 0.0
    %122 = vmatpush1.msra.mxu0 0.0
    %123 = vmatprep.subr.mxu0 0.0
    %124 = vmatpush1.msra.mxu0 0.0
    %125 = vmatprep.subr.mxu0 0.0
    %126 = vmatpush1.msra.mxu0 0.0
    %127 = vmatprep.subr.mxu0 0.0
    %128 = vmatpush1.msra.mxu0 0.0
    %129 = vmatprep.subr.mxu0 0.0
    %130 = vmatpush1.msra.mxu0 0.0
    %131 = vmatprep.subr.mxu0 0.0
    %132 = vmatpush1.msra.mxu0 0.0
    %133 = vmatprep.subr.mxu0 0.0
    %134 = vmatpush1.msra.mxu0 0.0
    %135 = vmatprep.subr.mxu0 0.0
    %136 = vmatpush1.msra.mxu0 0.0
    %137 = vmatprep.subr.mxu0 0.0
    %138 = vmatpush1.msra.mxu0 0.0
    %139 = vmatprep.subr.mxu0 0.0
    %140 = vmatpush1.msra.mxu0 0.0
    %141 = vmatprep.subr.mxu0 0.0
    %142 = vmatpush1.msra.mxu0 0.0
    %143 = vmatprep.subr.mxu0 0.0
    %144 = vmatpush1.msra.mxu0 0.0
    %145 = vmatprep.subr.mxu0 0.0
    %146 = vmatpush1.msra.mxu0 0.0
    %147 = vmatprep.subr.mxu0 0.0
    %148 = vmatpush1.msra.mxu0 0.0
    %149 = vmatprep.subr.mxu0 0.0
    %150 = vmatpush1.msra.mxu0 0.0
    %151 = vmatprep.subr.mxu0 0.0
    %152 = vmatpush1.msra.mxu0 0.0
    %153 = vmatprep.subr.mxu0 0.0
    %154 = vmatpush1.msra.mxu0 0.0
    %155 = vmatprep.subr.mxu0 0.0
    %156 = vmatpush1.msra.mxu0 0.0
    %157 = vmatprep.subr.mxu0 0.0
    %158 = vmatpush1.msra.mxu0 0.0
    %159 = vmatprep.subr.mxu0 0.0
    %160 = vmatpush1.msra.mxu0 0.0
    %161 = vmatprep.subr.mxu0 0.0
    %162 = vmatpush1.msra.mxu0 0.0
    %163 = vmatprep.subr.mxu0 0.0
    %164 = vmatpush1.msra.mxu0 0.0
    %165 = vmatprep.subr.mxu0 0.0
    %166 = vmatpush1.msra.mxu0 0.0
    %167 = vmatprep.subr.mxu0 0.0
    %168 = vmatpush1.msra.mxu0 0.0
    %169 = vmatprep.subr.mxu0 0.0
    %170 = vmatpush1.msra.mxu0 0.0
    %171 = vmatprep.subr.mxu0 0.0
    %172 = vmatpush1.msra.mxu0 0.0
    %173 = vmatprep.subr.mxu0 0.0
    %174 = vmatpush1.msra.mxu0 0.0
    %175 = vmatprep.subr.mxu0 0.0
    %176 = vmatpush1.msra.mxu0 0.0
    %177 = vmatprep.mubr.f32.mxu0 0.0
    %178 = vmatmul.mubr.f32.gmra.mrb[0].mxu0 %v111
    %v179 = vpop.f32.mrb[0].mxu0
    %v180 = vadd.f32 0.0, %v179
    %v181 = vpop.f32.mrb[0].mxu0
    %182 = vdwg.mxu0
    %v183 = vld [vmem:[%s3] sm:$0xff]
    %v184 = vld [vmem:[%s3 + $0x8] sm:$0xff]
    %v185 = vld [vmem:[%s3 + $0x10] sm:$0xff]
    %v186 = vld [vmem:[%s3 + $0x18] sm:$0xff]
    %v188 = vsel %vm110, %v96, 0
    %v191 = vsel %vm110, %v97, 0
    %193 = vmatprep.subr.mxu0 0.0
    %194 = vmatpush1.msra.mxu0 %v183
    %195 = vmatprep.subr.mxu0 0.0
    %196 = vmatpush1.msra.mxu0 %v184
    %197 = vmatprep.subr.mxu0 0.0
    %198 = vmatpush1.msra.mxu0 %v185
    %199 = vmatprep.subr.mxu0 0.0
    %200 = vmatpush1.msra.mxu0 %v186
    %201 = vmatprep.subr.mxu0 0.0
    %202 = vmatpush1.msra.mxu0 0.0
    %203 = vmatprep.subr.mxu0 0.0
    %204 = vmatpush1.msra.mxu0 0.0
    %205 = vmatprep.subr.mxu0 0.0
    %206 = vmatpush1.msra.mxu0 0.0
    %207 = vmatprep.subr.mxu0 0.0
    %208 = vmatpush1.msra.mxu0 0.0
    %209 = vmatprep.subr.mxu0 0.0
    %210 = vmatpush1.msra.mxu0 0.0
    %211 = vmatprep.subr.mxu0 0.0
    %212 = vmatpush1.msra.mxu0 0.0
    %213 = vmatprep.subr.mxu0 0.0
    %214 = vmatpush1.msra.mxu0 0.0
    %215 = vmatprep.subr.mxu0 0.0
    %216 = vmatpush1.msra.mxu0 0.0
    %217 = vmatprep.subr.mxu0 0.0
    %218 = vmatpush1.msra.mxu0 0.0
    %219 = vmatprep.subr.mxu0 0.0
    %220 = vmatpush1.msra.mxu0 0.0
    %221 = vmatprep.subr.mxu0 0.0
    %222 = vmatpush1.msra.mxu0 0.0
    %223 = vmatprep.subr.mxu0 0.0
    %224 = vmatpush1.msra.mxu0 0.0
    %225 = vmatprep.subr.mxu0 0.0
    %226 = vmatpush1.msra.mxu0 0.0
    %227 = vmatprep.subr.mxu0 0.0
    %228 = vmatpush1.msra.mxu0 0.0
    %229 = vmatprep.subr.mxu0 0.0
    %230 = vmatpush1.msra.mxu0 0.0
    %231 = vmatprep.subr.mxu0 0.0
    %232 = vmatpush1.msra.mxu0 0.0
    %233 = vmatprep.subr.mxu0 0.0
    %234 = vmatpush1.msra.mxu0 0.0
    %235 = vmatprep.subr.mxu0 0.0
    %236 = vmatpush1.msra.mxu0 0.0
    %237 = vmatprep.subr.mxu0 0.0
    %238 = vmatpush1.msra.mxu0 0.0
    %239 = vmatprep.subr.mxu0 0.0
    %240 = vmatpush1.msra.mxu0 0.0
    %241 = vmatprep.subr.mxu0 0.0
    %242 = vmatpush1.msra.mxu0 0.0
    %243 = vmatprep.subr.mxu0 0.0
    %244 = vmatpush1.msra.mxu0 0.0
    %245 = vmatprep.subr.mxu0 0.0
    %246 = vmatpush1.msra.mxu0 0.0
    %247 = vmatprep.subr.mxu0 0.0
    %248 = vmatpush1.msra.mxu0 0.0
    %249 = vmatprep.subr.mxu0 0.0
    %250 = vmatpush1.msra.mxu0 0.0
    %251 = vmatprep.subr.mxu0 0.0
    %252 = vmatpush1.msra.mxu0 0.0
    %253 = vmatprep.subr.mxu0 0.0
    %254 = vmatpush1.msra.mxu0 0.0
    %255 = vmatprep.subr.mxu0 0.0
    %256 = vmatpush1.msra.mxu0 0.0
    %257 = vmatprep.mubr.f32.mxu0 0.0
    %258 = vmatmul.mubr.f32.gmra.mrb[0].mxu0 %v188
    %v259 = vpop.f32.mrb[0].mxu0
    %v260 = vadd.f32 0.0, %v259
    %v261 = vpop.f32.mrb[0].mxu0
    %262 = vmatprep.mubr.f32.mxu0 0.0
    %263 = vmatmul.mubr.f32.gmra.mrb[0].mxu0 %v191
    %v264 = vpop.f32.mrb[0].mxu0
    %v265 = vadd.f32 0.0, %v264
    %v266 = vpop.f32.mrb[0].mxu0
    %267 = vdwg.mxu0
    %v268 = vld [vmem:[%s4] sm:$0xff]
    %v269 = vld [vmem:[%s4 + $0x8] sm:$0xff]
    %v270 = vld [vmem:[%s4 + $0x10] sm:$0xff]
    %v271 = vld [vmem:[%s4 + $0x18] sm:$0xff]
    %272 = vmatprep.subr.mxu0 0.0
    %273 = vmatpush1.msra.mxu0 %v268
    %274 = vmatprep.subr.mxu0 0.0
    %275 = vmatpush1.msra.mxu0 %v269
    %276 = vmatprep.subr.mxu0 0.0
    %277 = vmatpush1.msra.mxu0 %v270
    %278 = vmatprep.subr.mxu0 0.0
    %279 = vmatpush1.msra.mxu0 %v271
    %280 = vmatprep.subr.mxu0 0.0
    %281 = vmatpush1.msra.mxu0 0.0
    %282 = vmatprep.subr.mxu0 0.0
    %283 = vmatpush1.msra.mxu0 0.0
    %284 = vmatprep.subr.mxu0 0.0
    %285 = vmatpush1.msra.mxu0 0.0
    %286 = vmatprep.subr.mxu0 0.0
    %287 = vmatpush1.msra.mxu0 0.0
    %288 = vmatprep.subr.mxu0 0.0
    %289 = vmatpush1.msra.mxu0 0.0
    %290 = vmatprep.subr.mxu0 0.0
    %291 = vmatpush1.msra.mxu0 0.0
    %292 = vmatprep.subr.mxu0 0.0
    %293 = vmatpush1.msra.mxu0 0.0
    %294 = vmatprep.subr.mxu0 0.0
    %295 = vmatpush1.msra.mxu0 0.0
    %296 = vmatprep.subr.mxu0 0.0
    %297 = vmatpush1.msra.mxu0 0.0
    %298 = vmatprep.subr.mxu0 0.0
    %299 = vmatpush1.msra.mxu0 0.0
    %300 = vmatprep.subr.mxu0 0.0
    %301 = vmatpush1.msra.mxu0 0.0
    %302 = vmatprep.subr.mxu0 0.0
    %303 = vmatpush1.msra.mxu0 0.0
    %304 = vmatprep.subr.mxu0 0.0
    %305 = vmatpush1.msra.mxu0 0.0
    %306 = vmatprep.subr.mxu0 0.0
    %307 = vmatpush1.msra.mxu0 0.0
    %308 = vmatprep.subr.mxu0 0.0
    %309 = vmatpush1.msra.mxu0 0.0
    %310 = vmatprep.subr.mxu0 0.0
    %311 = vmatpush1.msra.mxu0 0.0
    %312 = vmatprep.subr.mxu0 0.0
    %313 = vmatpush1.msra.mxu0 0.0
    %314 = vmatprep.subr.mxu0 0.0
    %315 = vmatpush1.msra.mxu0 0.0
    %316 = vmatprep.subr.mxu0 0.0
    %317 = vmatpush1.msra.mxu0 0.0
    %318 = vmatprep.subr.mxu0 0.0
    %319 = vmatpush1.msra.mxu0 0.0
    %320 = vmatprep.subr.mxu0 0.0
    %321 = vmatpush1.msra.mxu0 0.0
    %322 = vmatprep.subr.mxu0 0.0
    %323 = vmatpush1.msra.mxu0 0.0
    %324 = vmatprep.subr.mxu0 0.0
    %325 = vmatpush1.msra.mxu0 0.0
    %326 = vmatprep.subr.mxu0 0.0
    %327 = vmatpush1.msra.mxu0 0.0
    %328 = vmatprep.subr.mxu0 0.0
    %329 = vmatpush1.msra.mxu0 0.0
    %330 = vmatprep.subr.mxu0 0.0
    %331 = vmatpush1.msra.mxu0 0.0
    %332 = vmatprep.subr.mxu0 0.0
    %333 = vmatpush1.msra.mxu0 0.0
    %334 = vmatprep.subr.mxu0 0.0
    %335 = vmatpush1.msra.mxu0 0.0
    %336 = vmatprep.mubr.f32.mxu0 0.0
    %337 = vmatmul.mubr.f32.gmra.mrb[0].mxu0 %v188
    %v338 = vpop.f32.mrb[0].mxu0
    %v339 = vadd.f32 0.0, %v338
    %v340 = vpop.f32.mrb[0].mxu0
    %341 = vmatprep.mubr.f32.mxu0 0.0
    %342 = vmatmul.mubr.f32.gmra.mrb[0].mxu0 %v191
    %v343 = vpop.f32.mrb[0].mxu0
    %v344 = vadd.f32 0.0, %v343
    %v345 = vpop.f32.mrb[0].mxu0
    %346 = vdwg.mxu0
    %v349 = vunpack.c.l.s4 1966171168
    %v350 = vunpack.c.0.s8 %v349
    %v351 = vlaneseq
    %v352 = vshrl.u32 %v351, 7
    %v353 = vsub.s32 %v350, %v352
    %v354 = vrot.slane %v180, %v353
    %v355 = vcombine.high %v354, %v354
    %v357 = vunpack.c.l.s4 1966171168
    %v358 = vunpack.c.0.s8 %v357
    %v359 = vlaneseq
    %v360 = vshrl.u32 %v359, 7
    %v361 = vsub.s32 %v358, %v360
    %v362 = vrot.slane %v354, %v361
    %v364 = vunpack.c.l.s4 1966171168
    %v365 = vunpack.c.0.s8 %v364
    %v366 = vlaneseq
    %v367 = vshrl.u32 %v366, 7
    %v368 = vsub.s32 %v365, %v367
    %v369 = vrot.slane %v355, %v368
    %v370 = vlaneseq
    %v371 = vshrl.u32 %v370, 7
    %v372 = vsub.s32 0, %v371
    %v373 = vrot.slane %v362, %v372
    %v374 = vlaneseq
    %v375 = vshrl.u32 %v374, 7
    %v376 = vsub.s32 0, %v375
    %v377 = vrot.slane %v369, %v376
    %v380 = vmul.f32 %v373, %v260
    %v381 = vmul.f32 %v377, %v265
    %v382 = vld [vmem:[%s5] sm:$0xff]
    %v383 = vld [vmem:[%s5 + $0x8] sm:$0xff]
    %v384 = vld [vmem:[%s5 + $0x10] sm:$0xff]
    %v385 = vld [vmem:[%s5 + $0x18] sm:$0xff]
    %v387 = vsel %vm110, %v380, 0
    %v390 = vsel %vm110, %v381, 0
    %392 = vmatprep.subr.mxu0 0.0
    %393 = vmatpush1.msra.mxu0 %v382
    %394 = vmatprep.subr.mxu0 0.0
    %395 = vmatpush1.msra.mxu0 %v383
    %396 = vmatprep.subr.mxu0 0.0
    %397 = vmatpush1.msra.mxu0 %v384
    %398 = vmatprep.subr.mxu0 0.0
    %399 = vmatpush1.msra.mxu0 %v385
    %400 = vmatprep.subr.mxu0 0.0
    %401 = vmatpush1.msra.mxu0 0.0
    %402 = vmatprep.subr.mxu0 0.0
    %403 = vmatpush1.msra.mxu0 0.0
    %404 = vmatprep.subr.mxu0 0.0
    %405 = vmatpush1.msra.mxu0 0.0
    %406 = vmatprep.subr.mxu0 0.0
    %407 = vmatpush1.msra.mxu0 0.0
    %408 = vmatprep.subr.mxu0 0.0
    %409 = vmatpush1.msra.mxu0 0.0
    %410 = vmatprep.subr.mxu0 0.0
    %411 = vmatpush1.msra.mxu0 0.0
    %412 = vmatprep.subr.mxu0 0.0
    %413 = vmatpush1.msra.mxu0 0.0
    %414 = vmatprep.subr.mxu0 0.0
    %415 = vmatpush1.msra.mxu0 0.0
    %416 = vmatprep.subr.mxu0 0.0
    %417 = vmatpush1.msra.mxu0 0.0
    %418 = vmatprep.subr.mxu0 0.0
    %419 = vmatpush1.msra.mxu0 0.0
    %420 = vmatprep.subr.mxu0 0.0
    %421 = vmatpush1.msra.mxu0 0.0
    %422 = vmatprep.subr.mxu0 0.0
    %423 = vmatpush1.msra.mxu0 0.0
    %424 = vmatprep.subr.mxu0 0.0
    %425 = vmatpush1.msra.mxu0 0.0
    %426 = vmatprep.subr.mxu0 0.0
    %427 = vmatpush1.msra.mxu0 0.0
    %428 = vmatprep.subr.mxu0 0.0
    %429 = vmatpush1.msra.mxu0 0.0
    %430 = vmatprep.subr.mxu0 0.0
    %431 = vmatpush1.msra.mxu0 0.0
    %432 = vmatprep.subr.mxu0 0.0
    %433 = vmatpush1.msra.mxu0 0.0
    %434 = vmatprep.subr.mxu0 0.0
    %435 = vmatpush1.msra.mxu0 0.0
    %436 = vmatprep.subr.mxu0 0.0
    %437 = vmatpush1.msra.mxu0 0.0
    %438 = vmatprep.subr.mxu0 0.0
    %439 = vmatpush1.msra.mxu0 0.0
    %440 = vmatprep.subr.mxu0 0.0
    %441 = vmatpush1.msra.mxu0 0.0
    %442 = vmatprep.subr.mxu0 0.0
    %443 = vmatpush1.msra.mxu0 0.0
    %444 = vmatprep.subr.mxu0 0.0
    %445 = vmatpush1.msra.mxu0 0.0
    %446 = vmatprep.subr.mxu0 0.0
    %447 = vmatpush1.msra.mxu0 0.0
    %448 = vmatprep.subr.mxu0 0.0
    %449 = vmatpush1.msra.mxu0 0.0
    %450 = vmatprep.subr.mxu0 0.0
    %451 = vmatpush1.msra.mxu0 0.0
    %452 = vmatprep.subr.mxu0 0.0
    %453 = vmatpush1.msra.mxu0 0.0
    %454 = vmatprep.subr.mxu0 0.0
    %455 = vmatpush1.msra.mxu0 0.0
    %456 = vmatprep.mubr.f32.mxu0 0.0
    %457 = vmatmul.mubr.f32.gmra.mrb[0].mxu0 %v387
    %v458 = vpop.f32.mrb[0].mxu0
    %v459 = vadd.f32 0.0, %v458
    %v460 = vpop.f32.mrb[0].mxu0
    %461 = vmatprep.mubr.f32.mxu0 0.0
    %462 = vmatmul.mubr.f32.gmra.mrb[0].mxu0 %v390
    %v463 = vpop.f32.mrb[0].mxu0
    %v464 = vadd.f32 0.0, %v463
    %v465 = vpop.f32.mrb[0].mxu0
    %466 = vdwg.mxu0
    %v467 = vlaneseq
    %v468 = vshrl.u32 %v467, 7
    %v469 = vstv %s95
    %vm470 = vcmp.le.s32.totalorder %v468, %v469
    %v471 = vsel %vm470, 1, 0
    %vm472 = vcmp.eq.s32.totalorder %v471, 1
    %v473 = vsel %vm472, %v459, -1.7014117e+38
    %v474 = vsel %vm472, %v464, -1.7014117e+38
    %vm475 = vcmask 31744
    %v476 = vsel %vm475, %v473, -inf
    %v477 = vrot.slane %v476, 4
    %v478 = vmax.f32 %v476, %v477
    %v479 = vrot.slane %v478, 2
    %v480 = vmax.f32 %v478, %v479
    %v481 = vrot.slane %v480, 1
    %v482 = vmax.f32 %v480, %v481
    %v483 = vsel %vm475, %v474, -inf
    %v484 = vrot.slane %v483, 4
    %v485 = vmax.f32 %v483, %v484
    %v486 = vrot.slane %v485, 2
    %v487 = vmax.f32 %v485, %v486
    %v488 = vrot.slane %v487, 1
    %v489 = vmax.f32 %v487, %v488
    %v490 = vsub.f32 %v473, %v482
    %v491 = vsub.f32 %v474, %v489
    %v492 = vmul.f32 %v490, 1.442695
    %v493 = vpow.pop %v492
    %v494 = vmul.f32 %v491, 1.442695
    %v495 = vpow.pop %v494
    %v496 = vsel %vm475, %v493, 0.0
    %v497 = vrot.slane %v496, 4
    %v498 = vadd.f32 %v496, %v497
    %v499 = vrot.slane %v498, 2
    %v500 = vadd.f32 %v498, %v499
    %v501 = vrot.slane %v500, 1
    %v502 = vadd.f32 %v500, %v501
    %v503 = vsel %vm475, %v495, 0.0
    %v504 = vrot.slane %v503, 4
    %v505 = vadd.f32 %v503, %v504
    %v506 = vrot.slane %v505, 2
    %v507 = vadd.f32 %v505, %v506
    %v508 = vrot.slane %v507, 1
    %v509 = vadd.f32 %v507, %v508
    %v510 = vrcp.pop %v502
    %v511 = vrcp.pop %v509
    %v512 = vmul.f32 %v493, %v510
    %v513 = vmul.f32 %v495, %v511
    %v514 = vld [vmem:[#allocation7] sm:$0xf]
    %v516 = vsel %vm475, %v512, 0
    %v519 = vsel %vm475, %v513, 0
    %vm521 = vcmask 1043456
    %v523 = vsel %vm521, %v514, 0
    %525 = vmatprep.subr.mxu0 0.0
    %526 = vmatpush1.msra.mxu0 %v523
    %527 = vmatprep.subr.mxu0 0.0
    %528 = vmatpush1.msra.mxu0 0.0
    %529 = vmatprep.subr.mxu0 0.0
    %530 = vmatpush1.msra.mxu0 0.0
    %531 = vmatprep.subr.mxu0 0.0
    %532 = vmatpush1.msra.mxu0 0.0
    %533 = vmatprep.subr.mxu0 0.0
    %534 = vmatpush1.msra.mxu0 0.0
    %535 = vmatprep.subr.mxu0 0.0
    %536 = vmatpush1.msra.mxu0 0.0
    %537 = vmatprep.subr.mxu0 0.0
    %538 = vmatpush1.msra.mxu0 0.0
    %539 = vmatprep.subr.mxu0 0.0
    %540 = vmatpush1.msra.mxu0 0.0
    %541 = vmatprep.subr.mxu0 0.0
    %542 = vmatpush1.msra.mxu0 0.0
    %543 = vmatprep.subr.mxu0 0.0
    %544 = vmatpush1.msra.mxu0 0.0
    %545 = vmatprep.subr.mxu0 0.0
    %546 = vmatpush1.msra.mxu0 0.0
    %547 = vmatprep.subr.mxu0 0.0
    %548 = vmatpush1.msra.mxu0 0.0
    %549 = vmatprep.subr.mxu0 0.0
    %550 = vmatpush1.msra.mxu0 0.0
    %551 = vmatprep.subr.mxu0 0.0
    %552 = vmatpush1.msra.mxu0 0.0
    %553 = vmatprep.subr.mxu0 0.0
    %554 = vmatpush1.msra.mxu0 0.0
    %555 = vmatprep.subr.mxu0 0.0
    %556 = vmatpush1.msra.mxu0 0.0
    %557 = vmatprep.subr.mxu0 0.0
    %558 = vmatpush1.msra.mxu0 0.0
    %559 = vmatprep.subr.mxu0 0.0
    %560 = vmatpush1.msra.mxu0 0.0
    %561 = vmatprep.subr.mxu0 0.0
    %562 = vmatpush1.msra.mxu0 0.0
    %563 = vmatprep.subr.mxu0 0.0
    %564 = vmatpush1.msra.mxu0 0.0
    %565 = vmatprep.subr.mxu0 0.0
    %566 = vmatpush1.msra.mxu0 0.0
    %567 = vmatprep.subr.mxu0 0.0
    %568 = vmatpush1.msra.mxu0 0.0
    %569 = vmatprep.subr.mxu0 0.0
    %570 = vmatpush1.msra.mxu0 0.0
    %571 = vmatprep.subr.mxu0 0.0
    %572 = vmatpush1.msra.mxu0 0.0
    %573 = vmatprep.subr.mxu0 0.0
    %574 = vmatpush1.msra.mxu0 0.0
    %575 = vmatprep.subr.mxu0 0.0
    %576 = vmatpush1.msra.mxu0 0.0
    %577 = vmatprep.subr.mxu0 0.0
    %578 = vmatpush1.msra.mxu0 0.0
    %579 = vmatprep.subr.mxu0 0.0
    %580 = vmatpush1.msra.mxu0 0.0
    %581 = vmatprep.subr.mxu0 0.0
    %582 = vmatpush1.msra.mxu0 0.0
    %583 = vmatprep.subr.mxu0 0.0
    %584 = vmatpush1.msra.mxu0 0.0
    %585 = vmatprep.subr.mxu0 0.0
    %586 = vmatpush1.msra.mxu0 0.0
    %587 = vmatprep.subr.mxu0 0.0
    %588 = vmatpush1.msra.mxu0 0.0
    %589 = vmatprep.mubr.f32.mxu0 0.0
    %590 = vmatmul.mubr.f32.gmra.mrb[0].mxu0 %v516
    %v591 = vpop.f32.mrb[0].mxu0
    %v592 = vadd.f32 0.0, %v591
    %v593 = vpop.f32.mrb[0].mxu0
    %594 = vmatprep.mubr.f32.mxu0 0.0
    %595 = vmatmul.mubr.f32.gmra.mrb[0].mxu0 %v519
    %v596 = vpop.f32.mrb[0].mxu0
    %v597 = vadd.f32 0.0, %v596
    %v598 = vpop.f32.mrb[0].mxu0
    %599 = vdwg.mxu0
    %v600 = vmul.f32 %v592, %v339
    %v601 = vmul.f32 %v597, %v344
    %v602 = vsel %vm110, %v600, 0.0
    %v603 = vrot.slane %v602, 4
    %v604 = vadd.f32 %v602, %v603
    %v605 = vrot.slane %v604, 2
    %v606 = vadd.f32 %v604, %v605
    %v607 = vrot.slane %v606, 1
    %v608 = vadd.f32 %v606, %v607
    %v609 = vsel %vm110, %v601, 0.0
    %v610 = vrot.slane %v609, 4
    %v611 = vadd.f32 %v609, %v610
    %v612 = vrot.slane %v611, 2
    %v613 = vadd.f32 %v611, %v612
    %v614 = vrot.slane %v613, 1
    %v615 = vadd.f32 %v613, %v614
    %v616 = vld [vmem:[#allocation9] sm:$0xff]
    %v617 = vld [vmem:[#allocation9 + $0x8] sm:$0xff]
    %v618 = vld [vmem:[#allocation9 + $0x10] sm:$0xff]
    %v619 = vld [vmem:[#allocation9 + $0x18] sm:$0xff]
    %v620 = vld [vmem:[%s8] sm:$0x1]
    %v622 = vlaneseq
    %v623 = vshrl.u32 %v622, 7
    %v624 = vsub.s32 0, %v623
    %v625 = vrot.slane %v620, %v624
    %v629 = vsel %vm108, %v615, %v608
    %v630 = vsel %vm110, %v629, 0
    %632 = vmatprep.subr.mxu0 0.0
    %633 = vmatpush1.msra.mxu0 %v616
    %634 = vmatprep.subr.mxu0 0.0
    %635 = vmatpush1.msra.mxu0 %v617
    %636 = vmatprep.subr.mxu0 0.0
    %637 = vmatpush1.msra.mxu0 %v618
    %638 = vmatprep.subr.mxu0 0.0
    %639 = vmatpush1.msra.mxu0 %v619
    %640 = vmatprep.subr.mxu0 0.0
    %641 = vmatpush1.msra.mxu0 0.0
    %642 = vmatprep.subr.mxu0 0.0
    %643 = vmatpush1.msra.mxu0 0.0
    %644 = vmatprep.subr.mxu0 0.0
    %645 = vmatpush1.msra.mxu0 0.0
    %646 = vmatprep.subr.mxu0 0.0
    %647 = vmatpush1.msra.mxu0 0.0
    %648 = vmatprep.subr.mxu0 0.0
    %649 = vmatpush1.msra.mxu0 0.0
    %650 = vmatprep.subr.mxu0 0.0
    %651 = vmatpush1.msra.mxu0 0.0
    %652 = vmatprep.subr.mxu0 0.0
    %653 = vmatpush1.msra.mxu0 0.0
    %654 = vmatprep.subr.mxu0 0.0
    %655 = vmatpush1.msra.mxu0 0.0
    %656 = vmatprep.subr.mxu0 0.0
    %657 = vmatpush1.msra.mxu0 0.0
    %658 = vmatprep.subr.mxu0 0.0
    %659 = vmatpush1.msra.mxu0 0.0
    %660 = vmatprep.subr.mxu0 0.0
    %661 = vmatpush1.msra.mxu0 0.0
    %662 = vmatprep.subr.mxu0 0.0
    %663 = vmatpush1.msra.mxu0 0.0
    %664 = vmatprep.subr.mxu0 0.0
    %665 = vmatpush1.msra.mxu0 0.0
    %666 = vmatprep.subr.mxu0 0.0
    %667 = vmatpush1.msra.mxu0 0.0
    %668 = vmatprep.subr.mxu0 0.0
    %669 = vmatpush1.msra.mxu0 0.0
    %670 = vmatprep.subr.mxu0 0.0
    %671 = vmatpush1.msra.mxu0 0.0
    %672 = vmatprep.subr.mxu0 0.0
    %673 = vmatpush1.msra.mxu0 0.0
    %674 = vmatprep.subr.mxu0 0.0
    %675 = vmatpush1.msra.mxu0 0.0
    %676 = vmatprep.subr.mxu0 0.0
    %677 = vmatpush1.msra.mxu0 0.0
    %678 = vmatprep.subr.mxu0 0.0
    %679 = vmatpush1.msra.mxu0 0.0
    %680 = vmatprep.subr.mxu0 0.0
    %681 = vmatpush1.msra.mxu0 0.0
    %682 = vmatprep.subr.mxu0 0.0
    %683 = vmatpush1.msra.mxu0 0.0
    %684 = vmatprep.subr.mxu0 0.0
    %685 = vmatpush1.msra.mxu0 0.0
    %686 = vmatprep.subr.mxu0 0.0
    %687 = vmatpush1.msra.mxu0 0.0
    %688 = vmatprep.subr.mxu0 0.0
    %689 = vmatpush1.msra.mxu0 0.0
    %690 = vmatprep.subr.mxu0 0.0
    %691 = vmatpush1.msra.mxu0 0.0
    %692 = vmatprep.subr.mxu0 0.0
    %693 = vmatpush1.msra.mxu0 0.0
    %694 = vmatprep.subr.mxu0 0.0
    %695 = vmatpush1.msra.mxu0 0.0
    %696 = vmatprep.mubr.f32.mxu0 0.0
    %697 = vmatmul.mubr.f32.gmra.mrb[0].mxu0 %v630
    %v698 = vpop.f32.mrb[0].mxu0
    %v699 = vadd.f32 %v625, %v698
    %v700 = vpop.f32.mrb[0].mxu0
    %701 = vdwg.mxu0
    %vm702 = vcmask 254976
    %v703 = vsel %vm702, %v699, 0.0
    %704 = vadd.xlane.f32.xlu0 %v703
    %v705 = vpop.xlane.xlu0 %704
    %v706 = vrcp.pop 32.0
    %v707 = vmul.f32 %v705, %v706
    %v708 = vsub.f32 %v699, %v707
    %v709 = vmul.f32 %v708, %v708
    %v710 = vsel %vm702, %v709, 0.0
    %711 = vadd.xlane.f32.xlu0 %v710
    %v712 = vpop.xlane.xlu0 %711
    %v713 = vmul.f32 %v712, %v706
    %v714 = vadd.f32 %v713, 1e-05
    %v715 = vrsqrt.pop %v714
    %v716 = vmul.f32 %v708, %v715
    %v717 = vld [vmem:[%s9] sm:$0x1]
    %v719 = vlaneseq
    %v720 = vshrl.u32 %v719, 7
    %v721 = vsub.s32 0, %v720
    %v722 = vrot.slane %v717, %v721
    %v724 = vmul.f32 %v716, %v722
    %v725 = vld [vmem:[%s10] sm:$0x1]
    %v727 = vlaneseq
    %v728 = vshrl.u32 %v727, 7
    %v729 = vsub.s32 0, %v728
    %v730 = vrot.slane %v725, %v729
    %v732 = vadd.f32 %v724, %v730
    %v733 = vld [vmem:[%s11] sm:$0xff]
    %v734 = vld [vmem:[%s11 + $0x8] sm:$0xff]
    %v735 = vld [vmem:[%s11 + $0x10] sm:$0xff]
    %v736 = vld [vmem:[%s11 + $0x18] sm:$0xff]
    %v737 = vld [vmem:[%s12] sm:$0x1]
    %v739 = vlaneseq
    %v740 = vshrl.u32 %v739, 7
    %v741 = vsub.s32 0, %v740
    %v742 = vrot.slane %v737, %v741
    %v745 = vsel %vm110, %v732, 0
    %747 = vmatprep.subr.mxu0 0.0
    %748 = vmatpush1.msra.mxu0 %v733
    %749 = vmatprep.subr.mxu0 0.0
    %750 = vmatpush1.msra.mxu0 %v734
    %751 = vmatprep.subr.mxu0 0.0
    %752 = vmatpush1.msra.mxu0 %v735
    %753 = vmatprep.subr.mxu0 0.0
    %754 = vmatpush1.msra.mxu0 %v736
    %755 = vmatprep.subr.mxu0 0.0
    %756 = vmatpush1.msra.mxu0 0.0
    %757 = vmatprep.subr.mxu0 0.0
    %758 = vmatpush1.msra.mxu0 0.0
    %759 = vmatprep.subr.mxu0 0.0
    %760 = vmatpush1.msra.mxu0 0.0
    %761 = vmatprep.subr.mxu0 0.0
    %762 = vmatpush1.msra.mxu0 0.0
    %763 = vmatprep.subr.mxu0 0.0
    %764 = vmatpush1.msra.mxu0 0.0
    %765 = vmatprep.subr.mxu0 0.0
    %766 = vmatpush1.msra.mxu0 0.0
    %767 = vmatprep.subr.mxu0 0.0
    %768 = vmatpush1.msra.mxu0 0.0
    %769 = vmatprep.subr.mxu0 0.0
    %770 = vmatpush1.msra.mxu0 0.0
    %771 = vmatprep.subr.mxu0 0.0
    %772 = vmatpush1.msra.mxu0 0.0
    %773 = vmatprep.subr.mxu0 0.0
    %774 = vmatpush1.msra.mxu0 0.0
    %775 = vmatprep.subr.mxu0 0.0
    %776 = vmatpush1.msra.mxu0 0.0
    %777 = vmatprep.subr.mxu0 0.0
    %778 = vmatpush1.msra.mxu0 0.0
    %779 = vmatprep.subr.mxu0 0.0
    %780 = vmatpush1.msra.mxu0 0.0
    %781 = vmatprep.subr.mxu0 0.0
    %782 = vmatpush1.msra.mxu0 0.0
    %783 = vmatprep.subr.mxu0 0.0
    %784 = vmatpush1.msra.mxu0 0.0
    %785 = vmatprep.subr.mxu0 0.0
    %786 = vmatpush1.msra.mxu0 0.0
    %787 = vmatprep.subr.mxu0 0.0
    %788 = vmatpush1.msra.mxu0 0.0
    %789 = vmatprep.subr.mxu0 0.0
    %790 = vmatpush1.msra.mxu0 0.0
    %791 = vmatprep.subr.mxu0 0.0
    %792 = vmatpush1.msra.mxu0 0.0
    %793 = vmatprep.subr.mxu0 0.0
    %794 = vmatpush1.msra.mxu0 0.0
    %795 = vmatprep.subr.mxu0 0.0
    %796 = vmatpush1.msra.mxu0 0.0
    %797 = vmatprep.subr.mxu0 0.0
    %798 = vmatpush1.msra.mxu0 0.0
    %799 = vmatprep.subr.mxu0 0.0
    %800 = vmatpush1.msra.mxu0 0.0
    %801 = vmatprep.subr.mxu0 0.0
    %802 = vmatpush1.msra.mxu0 0.0
    %803 = vmatprep.subr.mxu0 0.0
    %804 = vmatpush1.msra.mxu0 0.0
    %805 = vmatprep.subr.mxu0 0.0
    %806 = vmatpush1.msra.mxu0 0.0
    %807 = vmatprep.subr.mxu0 0.0
    %808 = vmatpush1.msra.mxu0 0.0
    %809 = vmatprep.subr.mxu0 0.0
    %810 = vmatpush1.msra.mxu0 0.0
    %811 = vmatprep.mubr.f32.mxu0 0.0
    %812 = vmatmul.mubr.f32.gmra.mrb[0].mxu0 %v745
    %v813 = vpop.f32.mrb[0].mxu0
    %v814 = vadd.f32 %v742, %v813
    %v815 = vpop.f32.mrb[0].mxu0
    %816 = vdwg.mxu0
    %v817 = vmax.f32 %v814, 0.0
    %v818 = vld [vmem:[%s13] sm:$0xff]
    %v819 = vld [vmem:[%s13 + $0x8] sm:$0xff]
    %v820 = vld [vmem:[%s13 + $0x10] sm:$0xff]
    %v821 = vld [vmem:[%s13 + $0x18] sm:$0xff]
    %v822 = vld [vmem:[%s13 + $0x20] sm:$0xff]
    %v823 = vld [vmem:[%s13 + $0x28] sm:$0xff]
    %v824 = vld [vmem:[%s13 + $0x30] sm:$0xff]
    %v825 = vld [vmem:[%s13 + $0x38] sm:$0xff]
    %v826 = vld [vmem:[%s14] sm:$0x1]
    %v828 = vlaneseq
    %v829 = vshrl.u32 %v828, 7
    %v830 = vsub.s32 0, %v829
    %v831 = vrot.slane %v826, %v830
    %vm833 = vcmask 523264
    %v835 = vsel %vm833, %v817, 0
    %837 = vmatprep.subr.mxu0 0.0
    %838 = vmatpush1.msra.mxu0 %v818
    %839 = vmatprep.subr.mxu0 0.0
    %840 = vmatpush1.msra.mxu0 %v819
    %841 = vmatprep.subr.mxu0 0.0
    %842 = vmatpush1.msra.mxu0 %v820
    %843 = vmatprep.subr.mxu0 0.0
    %844 = vmatpush1.msra.mxu0 %v821
    %845 = vmatprep.subr.mxu0 0.0
    %846 = vmatpush1.msra.mxu0 %v822
    %847 = vmatprep.subr.mxu0 0.0
    %848 = vmatpush1.msra.mxu0 %v823
    %849 = vmatprep.subr.mxu0 0.0
    %850 = vmatpush1.msra.mxu0 %v824
    %851 = vmatprep.subr.mxu0 0.0
    %852 = vmatpush1.msra.mxu0 %v825
    %853 = vmatprep.subr.mxu0 0.0
    %854 = vmatpush1.msra.mxu0 0.0
    %855 = vmatprep.subr.mxu0 0.0
    %856 = vmatpush1.msra.mxu0 0.0
    %857 = vmatprep.subr.mxu0 0.0
    %858 = vmatpush1.msra.mxu0 0.0
    %859 = vmatprep.subr.mxu0 0.0
    %860 = vmatpush1.msra.mxu0 0.0
    %861 = vmatprep.subr.mxu0 0.0
    %862 = vmatpush1.msra.mxu0 0.0
    %863 = vmatprep.subr.mxu0 0.0
    %864 = vmatpush1.msra.mxu0 0.0
    %865 = vmatprep.subr.mxu0 0.0
    %866 = vmatpush1.msra.mxu0 0.0
    %867 = vmatprep.subr.mxu0 0.0
    %868 = vmatpush1.msra.mxu0 0.0
    %869 = vmatprep.subr.mxu0 0.0
    %870 = vmatpush1.msra.mxu0 0.0
    %871 = vmatprep.subr.mxu0 0.0
    %872 = vmatpush1.msra.mxu0 0.0
    %873 = vmatprep.subr.mxu0 0.0
    %874 = vmatpush1.msra.mxu0 0.0
    %875 = vmatprep.subr.mxu0 0.0
    %876 = vmatpush1.msra.mxu0 0.0
    %877 = vmatprep.subr.mxu0 0.0
    %878 = vmatpush1.msra.mxu0 0.0
    %879 = vmatprep.subr.mxu0 0.0
    %880 = vmatpush1.msra.mxu0 0.0
    %881 = vmatprep.subr.mxu0 0.0
    %882 = vmatpush1.msra.mxu0 0.0
    %883 = vmatprep.subr.mxu0 0.0
    %884 = vmatpush1.msra.mxu0 0.0
    %885 = vmatprep.subr.mxu0 0.0
    %886 = vmatpush1.msra.mxu0 0.0
    %887 = vmatprep.subr.mxu0 0.0
    %888 = vmatpush1.msra.mxu0 0.0
    %889 = vmatprep.subr.mxu0 0.0
    %890 = vmatpush1.msra.mxu0 0.0
    %891 = vmatprep.subr.mxu0 0.0
    %892 = vmatpush1.msra.mxu0 0.0
    %893 = vmatprep.subr.mxu0 0.0
    %894 = vmatpush1.msra.mxu0 0.0
    %895 = vmatprep.subr.mxu0 0.0
    %896 = vmatpush1.msra.mxu0 0.0
    %897 = vmatprep.subr.mxu0 0.0
    %898 = vmatpush1.msra.mxu0 0.0
    %899 = vmatprep.subr.mxu0 0.0
    %900 = vmatpush1.msra.mxu0 0.0
    %901 = vmatprep.mubr.f32.mxu0 0.0
    %902 = vmatmul.mubr.f32.gmra.mrb[0].mxu0 %v835
    %v903 = vpop.f32.mrb[0].mxu0
    %v904 = vadd.f32 %v831, %v903
    %v905 = vpop.f32.mrb[0].mxu0
    %906 = vdwg.mxu0
    %v907 = vsel %vm702, %v904, 0.0
    %908 = vadd.xlane.f32.xlu0 %v907
    %v909 = vpop.xlane.xlu0 %908
    %v910 = vmul.f32 %v909, %v706
    %v911 = vsub.f32 %v904, %v910
    %v912 = vmul.f32 %v911, %v911
    %v913 = vsel %vm702, %v912, 0.0
    %914 = vadd.xlane.f32.xlu0 %v913
    %v915 = vpop.xlane.xlu0 %914
    %v916 = vmul.f32 %v915, %v706
    %v917 = vadd.f32 %v916, 1e-05
    %v918 = vrsqrt.pop %v917
    %v919 = vmul.f32 %v911, %v918
    %v920 = vld [vmem:[%s15] sm:$0x1]
    %v922 = vlaneseq
    %v923 = vshrl.u32 %v922, 7
    %v924 = vsub.s32 0, %v923
    %v925 = vrot.slane %v920, %v924
    %v927 = vmul.f32 %v919, %v925
    %v928 = vld [vmem:[%s16] sm:$0x1]
    %v930 = vlaneseq
    %v931 = vshrl.u32 %v930, 7
    %v932 = vsub.s32 0, %v931
    %v933 = vrot.slane %v928, %v932
    %v935 = vadd.f32 %v927, %v933
    %936 = vst.msk [vmem:[#allocation10] sm:$0x3] %vm702, %v935
    // Predicated region
    $region78: #{tpu_custom_call.1} parent=1 // pred_check
      _
    $region79: #{tpu_custom_call.1} parent=1 // pred_check_branch
      %938 = sbr.rel (0) target = $region81
    $region80: #{tpu_custom_call.1} parent=1 // pred_region
      %s940 = ssub.s32 32, 32
      %941 = vsyncadd [#allocation6], %s940
      %s943 = sshll.u32 [#allocation10], 4
      %s944 = int_to_ptr.vmem [resolvable:$true] %s943
      %946 = dma.vmem_to_hbm [thread:$0]  %s944, 32, %s17, [#allocation6]
    $region81: #{tpu_custom_call.1} parent=1 // pred_fallthru
      _
    // Predicated region
    $region82: #{tpu_custom_call.1} parent=1 // pred_check
      _
    $region83: #{tpu_custom_call.1} parent=1 // pred_check_branch
      %948 = sbr.rel (0) target = $region85
    $region84: #{tpu_custom_call.1} parent=1 // pred_region
      %949 = dma.done [#allocation6], 32
    $region85: #{tpu_custom_call.1} parent=1 // pred_fallthru
      _
    %950 = vsyncpa [#allocation5], 1
    %951 = vsyncpa [#allocation8], 1
    %952 = vsyncpa [#allocation6], 1

// kernel: tpu_custom_call.1
$region0: #{tpu_custom_call.1}
  #allocation0 [shape = 'u32[]', space=smem, size = 0x4, offset = 0x4, fixed_abs, tag = 'smem constant byte address 0x4 - core index']
  #allocation1 [shape = 'u32[144,128]{1,0:T(1,128)}', space=vmem, size = 0x12000, scoped, tag = 'internal scratch']
  #allocation2 [shape = 's32[1]{0}', space=sflag, size = 0x4, scoped, tag = 'scoped memory for tpu_custom_call.1']
  #allocation3 [shape = 's32[1]{0:T(128)S(6)}', space=smem, size = 0x200, scoped, tag = 'prefetched SMEM operand 0']
  %s0 = inlined_call_operand.<no memory space> [shape: s32[1], index: 0, kind: input, shape index: {}]
  %s1 = inlined_call_operand.hbm [shape: f32[2,8,32], index: 1, kind: input, shape index: {}]
  %s2 = inlined_call_operand.vmem [shape: f32[32,32], index: 2, kind: input, shape index: {}]
  %s3 = inlined_call_operand.vmem [shape: f32[32,32], index: 3, kind: input, shape index: {}]
  %s4 = inlined_call_operand.vmem [shape: f32[32,32], index: 4, kind: input, shape index: {}]
  %s5 = inlined_call_operand.vmem [shape: f32[32,4], index: 5, kind: input, shape index: {}]
  %s6 = inlined_call_operand.hbm [shape: f32[4,32], index: 6, kind: input, shape index: {}]
  %s7 = inlined_call_operand.hbm [shape: f32[32,32], index: 7, kind: input, shape index: {}]
  %s8 = inlined_call_operand.vmem [shape: f32[1,32], index: 8, kind: input, shape index: {}]
  %s9 = inlined_call_operand.vmem [shape: f32[1,32], index: 9, kind: input, shape index: {}]
  %s10 = inlined_call_operand.vmem [shape: f32[1,32], index: 10, kind: input, shape index: {}]
  %s11 = inlined_call_operand.vmem [shape: f32[32,64], index: 11, kind: input, shape index: {}]
  %s12 = inlined_call_operand.vmem [shape: f32[1,64], index: 12, kind: input, shape index: {}]
  %s13 = inlined_call_operand.vmem [shape: f32[64,32], index: 13, kind: input, shape index: {}]
  %s14 = inlined_call_operand.vmem [shape: f32[1,32], index: 14, kind: input, shape index: {}]
  %s15 = inlined_call_operand.vmem [shape: f32[1,32], index: 15, kind: input, shape index: {}]
  %s16 = inlined_call_operand.vmem [shape: f32[1,32], index: 16, kind: input, shape index: {}]
  %s17 = inlined_call_operand.hbm [shape: f32[2,32], index: 17, kind: output, shape index: {}]
  %s18 = sld [smem:[#allocation0]]
  $region86: #{tpu_custom_call.1} parent=0
    _
  %s20 = ssub.s32 1, %s18
  %s21 = scalar_select 0, %s20, %s18
  %22 = sst [smem:[#allocation3]] %s0
  $region1: #{tpu_custom_call.1} parent=0
    #allocation4 [shape = 'u8[8192]{0}', space=vmem, size = 0x2000, scoped, tag = 'input window, operand 1, single buffered']
    #allocation5 [shape = 's32[1]{0}', space=sflag, size = 0x4, scoped, tag = 'scoped memory for tpu_custom_call.1']
    #allocation6 [shape = 's32[1]{0}', space=sflag, size = 0x4, scoped, tag = 'scoped memory for tpu_custom_call.1']
    #allocation7 [shape = 'u8[2048]{0}', space=vmem, size = 0x800, scoped, tag = 'input window, operand 6, single buffered']
    #allocation8 [shape = 's32[1]{0}', space=sflag, size = 0x4, scoped, tag = 'scoped memory for tpu_custom_call.1']
    #allocation9 [shape = 'u8[16384]{0}', space=vmem, size = 0x4000, scoped, tag = 'input window, operand 7, single buffered']
    #allocation10 [shape = 'u8[1024]{0}', space=vmem, size = 0x400, scoped, tag = 'output window, operand 0, single buffered']
    %23 = vsyncpa [#allocation5], 0
    %24 = vsyncpa [#allocation8], 0
    %25 = vsyncpa [#allocation6], 0
    // Predicated region
    $region2: #{tpu_custom_call.1} parent=1 // pred_check
      _
    $region3: #{tpu_custom_call.1} parent=1 // pred_check_branch
      %27 = sbr.rel (0) target = $region5
    $region4: #{tpu_custom_call.1} parent=1 // pred_region
      %s29 = ssub.s32 256, 256
      %30 = vsyncadd [#allocation5], %s29
      %s31 = sshll.u32 [#allocation4], 4
      %s32 = int_to_ptr.vmem [resolvable:$true] %s31
      %37 = dma.hbm_to_vmem [thread:$0]  %s1, 256, %s32, [#allocation5], 128, 128, 8
    $region5: #{tpu_custom_call.1} parent=1 // pred_fallthru
      _
    // Predicated region
    $region6: #{tpu_custom_call.1} parent=1 // pred_check
      _
    $region7: #{tpu_custom_call.1} parent=1 // pred_check_branch
      %39 = sbr.rel (0) target = $region9
    $region8: #{tpu_custom_call.1} parent=1 // pred_region
      _
    $region9: #{tpu_custom_call.1} parent=1 // pred_fallthru
      _
    // Predicated region
    $region10: #{tpu_custom_call.1} parent=1 // pred_check
      _
    $region11: #{tpu_custom_call.1} parent=1 // pred_check_branch
      %41 = sbr.rel (0) target = $region13
    $region12: #{tpu_custom_call.1} parent=1 // pred_region
      _
    $region13: #{tpu_custom_call.1} parent=1 // pred_fallthru
      _
    // Predicated region
    $region14: #{tpu_custom_call.1} parent=1 // pred_check
      _
    $region15: #{tpu_custom_call.1} parent=1 // pred_check_branch
      %43 = sbr.rel (0) target = $region17
    $region16: #{tpu_custom_call.1} parent=1 // pred_region
      _
    $region17: #{tpu_custom_call.1} parent=1 // pred_fallthru
      _
    // Predicated region
    $region18: #{tpu_custom_call.1} parent=1 // pred_check
      _
    $region19: #{tpu_custom_call.1} parent=1 // pred_check_branch
      %45 = sbr.rel (0) target = $region21
    $region20: #{tpu_custom_call.1} parent=1 // pred_region
      _
    $region21: #{tpu_custom_call.1} parent=1 // pred_fallthru
      _
    // Predicated region
    $region22: #{tpu_custom_call.1} parent=1 // pred_check
      _
    $region23: #{tpu_custom_call.1} parent=1 // pred_check_branch
      %47 = sbr.rel (0) target = $region25
    $region24: #{tpu_custom_call.1} parent=1 // pred_region
      %s49 = ssub.s32 64, 64
      %50 = vsyncadd [#allocation8], %s49
      %s52 = sshll.u32 [#allocation7], 4
      %s53 = int_to_ptr.vmem [resolvable:$true] %s52
      %55 = dma.hbm_to_vmem [thread:$0]  %s6, 64, %s53, [#allocation8]
    $region25: #{tpu_custom_call.1} parent=1 // pred_fallthru
      _
    // Predicated region
    $region26: #{tpu_custom_call.1} parent=1 // pred_check
      _
    $region27: #{tpu_custom_call.1} parent=1 // pred_check_branch
      %57 = sbr.rel (0) target = $region29
    $region28: #{tpu_custom_call.1} parent=1 // pred_region
      %s59 = ssub.s32 512, 512
      %60 = vsyncadd [#allocation8], %s59
      %s61 = sshll.u32 [#allocation9], 4
      %s62 = int_to_ptr.vmem [resolvable:$true] %s61
      %67 = dma.hbm_to_vmem [thread:$0]  %s7, 512, %s62, [#allocation8], 128, 128, 8
    $region29: #{tpu_custom_call.1} parent=1 // pred_fallthru
      _
    // Predicated region
    $region30: #{tpu_custom_call.1} parent=1 // pred_check
      _
    $region31: #{tpu_custom_call.1} parent=1 // pred_check_branch
      %69 = sbr.rel (0) target = $region33
    $region32: #{tpu_custom_call.1} parent=1 // pred_region
      _
    $region33: #{tpu_custom_call.1} parent=1 // pred_fallthru
      _
    // Predicated region
    $region34: #{tpu_custom_call.1} parent=1 // pred_check
      _
    $region35: #{tpu_custom_call.1} parent=1 // pred_check_branch
      %71 = sbr.rel (0) target = $region37
    $region36: #{tpu_custom_call.1} parent=1 // pred_region
      _
    $region37: #{tpu_custom_call.1} parent=1 // pred_fallthru
      _
    // Predicated region
    $region38: #{tpu_custom_call.1} parent=1 // pred_check
      _
    $region39: #{tpu_custom_call.1} parent=1 // pred_check_branch
      %73 = sbr.rel (0) target = $region41
    $region40: #{tpu_custom_call.1} parent=1 // pred_region
      _
    $region41: #{tpu_custom_call.1} parent=1 // pred_fallthru
      _
    // Predicated region
    $region42: #{tpu_custom_call.1} parent=1 // pred_check
      _
    $region43: #{tpu_custom_call.1} parent=1 // pred_check_branch
      %75 = sbr.rel (0) target = $region45
    $region44: #{tpu_custom_call.1} parent=1 // pred_region
      _
    $region45: #{tpu_custom_call.1} parent=1 // pred_fallthru
      _
    // Predicated region
    $region46: #{tpu_custom_call.1} parent=1 // pred_check
      _
    $region47: #{tpu_custom_call.1} parent=1 // pred_check_branch
      %77 = sbr.rel (0) target = $region49
    $region48: #{tpu_custom_call.1} parent=1 // pred_region
      _
    $region49: #{tpu_custom_call.1} parent=1 // pred_fallthru
      _
    // Predicated region
    $region50: #{tpu_custom_call.1} parent=1 // pred_check
      _
    $region51: #{tpu_custom_call.1} parent=1 // pred_check_branch
      %79 = sbr.rel (0) target = $region53
    $region52: #{tpu_custom_call.1} parent=1 // pred_region
      _
    $region53: #{tpu_custom_call.1} parent=1 // pred_fallthru
      _
    // Predicated region
    $region54: #{tpu_custom_call.1} parent=1 // pred_check
      _
    $region55: #{tpu_custom_call.1} parent=1 // pred_check_branch
      %81 = sbr.rel (0) target = $region57
    $region56: #{tpu_custom_call.1} parent=1 // pred_region
      _
    $region57: #{tpu_custom_call.1} parent=1 // pred_fallthru
      _
    // Predicated region
    $region58: #{tpu_custom_call.1} parent=1 // pred_check
      _
    $region59: #{tpu_custom_call.1} parent=1 // pred_check_branch
      %83 = sbr.rel (0) target = $region61
    $region60: #{tpu_custom_call.1} parent=1 // pred_region
      _
    $region61: #{tpu_custom_call.1} parent=1 // pred_fallthru
      _
    // Predicated region
    $region62: #{tpu_custom_call.1} parent=1 // pred_check
      _
    $region63: #{tpu_custom_call.1} parent=1 // pred_check_branch
      %85 = sbr.rel (0) target = $region65
    $region64: #{tpu_custom_call.1} parent=1 // pred_region
      _
    $region65: #{tpu_custom_call.1} parent=1 // pred_fallthru
      _
    // Predicated region
    $region66: #{tpu_custom_call.1} parent=1 // pred_check
      _
    $region67: #{tpu_custom_call.1} parent=1 // pred_check_branch
      %87 = sbr.rel (0) target = $region69
    $region68: #{tpu_custom_call.1} parent=1 // pred_region
      %88 = dma.done [#allocation5], 256
    $region69: #{tpu_custom_call.1} parent=1 // pred_fallthru
      _
    // Predicated region
    $region70: #{tpu_custom_call.1} parent=1 // pred_check
      _
    $region71: #{tpu_custom_call.1} parent=1 // pred_check_branch
      %90 = sbr.rel (0) target = $region73
    $region72: #{tpu_custom_call.1} parent=1 // pred_region
      %91 = dma.done [#allocation8], 64
    $region73: #{tpu_custom_call.1} parent=1 // pred_fallthru
      _
    // Predicated region
    $region74: #{tpu_custom_call.1} parent=1 // pred_check
      _
    $region75: #{tpu_custom_call.1} parent=1 // pred_check_branch
      %93 = sbr.rel (0) target = $region77
    $region76: #{tpu_custom_call.1} parent=1 // pred_region
      %94 = dma.done [#allocation8], 512
    $region77: #{tpu_custom_call.1} parent=1 // pred_fallthru
      _
    %s95 = sld [smem:[#allocation3]]
    %v96 = vld [vmem:[#allocation4] sm:$0xff]
    %v97 = vld [vmem:[#allocation4 + $0x8] sm:$0xff]
    %s98 = scalar_lea.vmem [#allocation4], %s95
    %v99 = vld [vmem:[%s98] sm:$0x1]
    %v100 = vld [vmem:[%s98 + $0x8] sm:$0x1]
    %v101 = vld [vmem:[%s2] sm:$0xff]
    %v102 = vld [vmem:[%s2 + $0x8] sm:$0xff]
    %v103 = vld [vmem:[%s2 + $0x10] sm:$0xff]
    %v104 = vld [vmem:[%s2 + $0x18] sm:$0xff]
    %v107 = vrot.slane %v100, 7
    %vm108 = vcmask 1041409
    %v109 = vsel %vm108, %v107, %v99
    %vm110 = vcmask 261120
    %v111 = vsel %vm110, %v109, 0
    %113 = vmatprep.subr.mxu0 0.0
    %114 = vmatpush1.msra.mxu0 %v101
    %115 = vmatprep.subr.mxu0 0.0
    %116 = vmatpush1.msra.mxu0 %v102
    %117 = vmatprep.subr.mxu0 0.0
    %118 = vmatpush1.msra.mxu0 %v103
    %119 = vmatprep.subr.mxu0 0.0
    %120 = vmatpush1.msra.mxu0 %v104
    %121 = vmatprep.subr.mxu0 0.0
    %122 = vmatpush1.msra.mxu0 0.0
    %123 = vmatprep.subr.mxu0 0.0
    %124 = vmatpush1.msra.mxu0 0.0
    %125 = vmatprep.subr.mxu0 0.0
    %126 = vmatpush1.msra.mxu0 0.0
    %127 = vmatprep.subr.mxu0 0.0
    %128 = vmatpush1.msra.mxu0 0.0
    %129 = vmatprep.subr.mxu0 0.0
    %130 = vmatpush1.msra.mxu0 0.0
    %131 = vmatprep.subr.mxu0 0.0
    %132 = vmatpush1.msra.mxu0 0.0
    %133 = vmatprep.subr.mxu0 0.0
    %134 = vmatpush1.msra.mxu0 0.0
    %135 = vmatprep.subr.mxu0 0.0
    %136 = vmatpush1.msra.mxu0 0.0
    %137 = vmatprep.subr.mxu0 0.0
    %138 = vmatpush1.msra.mxu0 0.0
    %139 = vmatprep.subr.mxu0 0.0
    %140 = vmatpush1.msra.mxu0 0.0
    %141 = vmatprep.subr.mxu0 0.0
    %142 = vmatpush1.msra.mxu0 0.0
    %143 = vmatprep.subr.mxu0 0.0
    %144 = vmatpush1.msra.mxu0 0.0
    %145 = vmatprep.subr.mxu0 0.0
    %146 = vmatpush1.msra.mxu0 0.0
    %147 = vmatprep.subr.mxu0 0.0
    %148 = vmatpush1.msra.mxu0 0.0
    %149 = vmatprep.subr.mxu0 0.0
    %150 = vmatpush1.msra.mxu0 0.0
    %151 = vmatprep.subr.mxu0 0.0
    %152 = vmatpush1.msra.mxu0 0.0
    %153 = vmatprep.subr.mxu0 0.0
    %154 = vmatpush1.msra.mxu0 0.0
    %155 = vmatprep.subr.mxu0 0.0
    %156 = vmatpush1.msra.mxu0 0.0
    %157 = vmatprep.subr.mxu0 0.0
    %158 = vmatpush1.msra.mxu0 0.0
    %159 = vmatprep.subr.mxu0 0.0
    %160 = vmatpush1.msra.mxu0 0.0
    %161 = vmatprep.subr.mxu0 0.0
    %162 = vmatpush1.msra.mxu0 0.0
    %163 = vmatprep.subr.mxu0 0.0
    %164 = vmatpush1.msra.mxu0 0.0
    %165 = vmatprep.subr.mxu0 0.0
    %166 = vmatpush1.msra.mxu0 0.0
    %167 = vmatprep.subr.mxu0 0.0
    %168 = vmatpush1.msra.mxu0 0.0
    %169 = vmatprep.subr.mxu0 0.0
    %170 = vmatpush1.msra.mxu0 0.0
    %171 = vmatprep.subr.mxu0 0.0
    %172 = vmatpush1.msra.mxu0 0.0
    %173 = vmatprep.subr.mxu0 0.0
    %174 = vmatpush1.msra.mxu0 0.0
    %175 = vmatprep.subr.mxu0 0.0
    %176 = vmatpush1.msra.mxu0 0.0
    %177 = vmatprep.mubr.f32.mxu0 0.0
    %178 = vmatmul.mubr.f32.gmra.mrb[0].mxu0 %v111
    %v179 = vpop.f32.mrb[0].mxu0
    %v180 = vadd.f32 0.0, %v179
    %v181 = vpop.f32.mrb[0].mxu0
    %182 = vdwg.mxu0
    %v183 = vld [vmem:[%s3] sm:$0xff]
    %v184 = vld [vmem:[%s3 + $0x8] sm:$0xff]
    %v185 = vld [vmem:[%s3 + $0x10] sm:$0xff]
    %v186 = vld [vmem:[%s3 + $0x18] sm:$0xff]
    %v188 = vsel %vm110, %v96, 0
    %v191 = vsel %vm110, %v97, 0
    %193 = vmatprep.subr.mxu0 0.0
    %194 = vmatpush1.msra.mxu0 %v183
    %195 = vmatprep.subr.mxu0 0.0
    %196 = vmatpush1.msra.mxu0 %v184
    %197 = vmatprep.subr.mxu0 0.0
    %198 = vmatpush1.msra.mxu0 %v185
    %199 = vmatprep.subr.mxu0 0.0
    %200 = vmatpush1.msra.mxu0 %v186
    %201 = vmatprep.subr.mxu0 0.0
    %202 = vmatpush1.msra.mxu0 0.0
    %203 = vmatprep.subr.mxu0 0.0
    %204 = vmatpush1.msra.mxu0 0.0
    %205 = vmatprep.subr.mxu0 0.0
    %206 = vmatpush1.msra.mxu0 0.0
    %207 = vmatprep.subr.mxu0 0.0
    %208 = vmatpush1.msra.mxu0 0.0
    %209 = vmatprep.subr.mxu0 0.0
    %210 = vmatpush1.msra.mxu0 0.0
    %211 = vmatprep.subr.mxu0 0.0
    %212 = vmatpush1.msra.mxu0 0.0
    %213 = vmatprep.subr.mxu0 0.0
    %214 = vmatpush1.msra.mxu0 0.0
    %215 = vmatprep.subr.mxu0 0.0
    %216 = vmatpush1.msra.mxu0 0.0
    %217 = vmatprep.subr.mxu0 0.0
    %218 = vmatpush1.msra.mxu0 0.0
    %219 = vmatprep.subr.mxu0 0.0
    %220 = vmatpush1.msra.mxu0 0.0
    %221 = vmatprep.subr.mxu0 0.0
    %222 = vmatpush1.msra.mxu0 0.0
    %223 = vmatprep.subr.mxu0 0.0
    %224 = vmatpush1.msra.mxu0 0.0
    %225 = vmatprep.subr.mxu0 0.0
    %226 = vmatpush1.msra.mxu0 0.0
    %227 = vmatprep.subr.mxu0 0.0
    %228 = vmatpush1.msra.mxu0 0.0
    %229 = vmatprep.subr.mxu0 0.0
    %230 = vmatpush1.msra.mxu0 0.0
    %231 = vmatprep.subr.mxu0 0.0
    %232 = vmatpush1.msra.mxu0 0.0
    %233 = vmatprep.subr.mxu0 0.0
    %234 = vmatpush1.msra.mxu0 0.0
    %235 = vmatprep.subr.mxu0 0.0
    %236 = vmatpush1.msra.mxu0 0.0
    %237 = vmatprep.subr.mxu0 0.0
    %238 = vmatpush1.msra.mxu0 0.0
    %239 = vmatprep.subr.mxu0 0.0
    %240 = vmatpush1.msra.mxu0 0.0
    %241 = vmatprep.subr.mxu0 0.0
    %242 = vmatpush1.msra.mxu0 0.0
    %243 = vmatprep.subr.mxu0 0.0
    %244 = vmatpush1.msra.mxu0 0.0
    %245 = vmatprep.subr.mxu0 0.0
    %246 = vmatpush1.msra.mxu0 0.0
    %247 = vmatprep.subr.mxu0 0.0
    %248 = vmatpush1.msra.mxu0 0.0
    %249 = vmatprep.subr.mxu0 0.0
    %250 = vmatpush1.msra.mxu0 0.0
    %251 = vmatprep.subr.mxu0 0.0
    %252 = vmatpush1.msra.mxu0 0.0
    %253 = vmatprep.subr.mxu0 0.0
    %254 = vmatpush1.msra.mxu0 0.0
    %255 = vmatprep.subr.mxu0 0.0
    %256 = vmatpush1.msra.mxu0 0.0
    %257 = vmatprep.mubr.f32.mxu0 0.0
    %258 = vmatmul.mubr.f32.gmra.mrb[0].mxu0 %v188
    %v259 = vpop.f32.mrb[0].mxu0
    %v260 = vadd.f32 0.0, %v259
    %v261 = vpop.f32.mrb[0].mxu0
    %262 = vmatprep.mubr.f32.mxu0 0.0
    %263 = vmatmul.mubr.f32.gmra.mrb[0].mxu0 %v191
    %v264 = vpop.f32.mrb[0].mxu0
    %v265 = vadd.f32 0.0, %v264
    %v266 = vpop.f32.mrb[0].mxu0
    %267 = vdwg.mxu0
    %v268 = vld [vmem:[%s4] sm:$0xff]
    %v269 = vld [vmem:[%s4 + $0x8] sm:$0xff]
    %v270 = vld [vmem:[%s4 + $0x10] sm:$0xff]
    %v271 = vld [vmem:[%s4 + $0x18] sm:$0xff]
    %272 = vmatprep.subr.mxu0 0.0
    %273 = vmatpush1.msra.mxu0 %v268
    %274 = vmatprep.subr.mxu0 0.0
    %275 = vmatpush1.msra.mxu0 %v269
    %276 = vmatprep.subr.mxu0 0.0
    %277 = vmatpush1.msra.mxu0 %v270
    %278 = vmatprep.subr.mxu0 0.0
    %279 = vmatpush1.msra.mxu0 %v271
    %280 = vmatprep.subr.mxu0 0.0
    %281 = vmatpush1.msra.mxu0 0.0
    %282 = vmatprep.subr.mxu0 0.0
    %283 = vmatpush1.msra.mxu0 0.0
    %284 = vmatprep.subr.mxu0 0.0
    %285 = vmatpush1.msra.mxu0 0.0
    %286 = vmatprep.subr.mxu0 0.0
    %287 = vmatpush1.msra.mxu0 0.0
    %288 = vmatprep.subr.mxu0 0.0
    %289 = vmatpush1.msra.mxu0 0.0
    %290 = vmatprep.subr.mxu0 0.0
    %291 = vmatpush1.msra.mxu0 0.0
    %292 = vmatprep.subr.mxu0 0.0
    %293 = vmatpush1.msra.mxu0 0.0
    %294 = vmatprep.subr.mxu0 0.0
    %295 = vmatpush1.msra.mxu0 0.0
    %296 = vmatprep.subr.mxu0 0.0
    %297 = vmatpush1.msra.mxu0 0.0
    %298 = vmatprep.subr.mxu0 0.0
    %299 = vmatpush1.msra.mxu0 0.0
    %300 = vmatprep.subr.mxu0 0.0
    %301 = vmatpush1.msra.mxu0 0.0
    %302 = vmatprep.subr.mxu0 0.0
    %303 = vmatpush1.msra.mxu0 0.0
    %304 = vmatprep.subr.mxu0 0.0
    %305 = vmatpush1.msra.mxu0 0.0
    %306 = vmatprep.subr.mxu0 0.0
    %307 = vmatpush1.msra.mxu0 0.0
    %308 = vmatprep.subr.mxu0 0.0
    %309 = vmatpush1.msra.mxu0 0.0
    %310 = vmatprep.subr.mxu0 0.0
    %311 = vmatpush1.msra.mxu0 0.0
    %312 = vmatprep.subr.mxu0 0.0
    %313 = vmatpush1.msra.mxu0 0.0
    %314 = vmatprep.subr.mxu0 0.0
    %315 = vmatpush1.msra.mxu0 0.0
    %316 = vmatprep.subr.mxu0 0.0
    %317 = vmatpush1.msra.mxu0 0.0
    %318 = vmatprep.subr.mxu0 0.0
    %319 = vmatpush1.msra.mxu0 0.0
    %320 = vmatprep.subr.mxu0 0.0
    %321 = vmatpush1.msra.mxu0 0.0
    %322 = vmatprep.subr.mxu0 0.0
    %323 = vmatpush1.msra.mxu0 0.0
    %324 = vmatprep.subr.mxu0 0.0
    %325 = vmatpush1.msra.mxu0 0.0
    %326 = vmatprep.subr.mxu0 0.0
    %327 = vmatpush1.msra.mxu0 0.0
    %328 = vmatprep.subr.mxu0 0.0
    %329 = vmatpush1.msra.mxu0 0.0
    %330 = vmatprep.subr.mxu0 0.0
    %331 = vmatpush1.msra.mxu0 0.0
    %332 = vmatprep.subr.mxu0 0.0
    %333 = vmatpush1.msra.mxu0 0.0
    %334 = vmatprep.subr.mxu0 0.0
    %335 = vmatpush1.msra.mxu0 0.0
    %336 = vmatprep.mubr.f32.mxu0 0.0
    %337 = vmatmul.mubr.f32.gmra.mrb[0].mxu0 %v188
    %v338 = vpop.f32.mrb[0].mxu0
    %v339 = vadd.f32 0.0, %v338
    %v340 = vpop.f32.mrb[0].mxu0
    %341 = vmatprep.mubr.f32.mxu0 0.0
    %342 = vmatmul.mubr.f32.gmra.mrb[0].mxu0 %v191
    %v343 = vpop.f32.mrb[0].mxu0
    %v344 = vadd.f32 0.0, %v343
    %v345 = vpop.f32.mrb[0].mxu0
    %346 = vdwg.mxu0
    %v349 = vunpack.c.l.s4 1966171168
    %v350 = vunpack.c.0.s8 %v349
    %v351 = vlaneseq
    %v352 = vshrl.u32 %v351, 7
    %v353 = vsub.s32 %v350, %v352
    %v354 = vrot.slane %v180, %v353
    %v355 = vcombine.high %v354, %v354
    %v357 = vunpack.c.l.s4 1966171168
    %v358 = vunpack.c.0.s8 %v357
    %v359 = vlaneseq
    %v360 = vshrl.u32 %v359, 7
    %v361 = vsub.s32 %v358, %v360
    %v362 = vrot.slane %v354, %v361
    %v364 = vunpack.c.l.s4 1966171168
    %v365 = vunpack.c.0.s8 %v364
    %v366 = vlaneseq
    %v367 = vshrl.u32 %v366, 7
    %v368 = vsub.s32 %v365, %v367
    %v369 = vrot.slane %v355, %v368
    %v370 = vlaneseq
    %v371 = vshrl.u32 %v370, 7
    %v372 = vsub.s32 0, %v371
    %v373 = vrot.slane %v362, %v372
    %v374 = vlaneseq
    %v375 = vshrl.u32 %v374, 7
    %v376 = vsub.s32 0, %v375
    %v377 = vrot.slane %v369, %v376
    %v380 = vmul.f32 %v373, %v260
    %v381 = vmul.f32 %v377, %v265
    %v382 = vld [vmem:[%s5] sm:$0xff]
    %v383 = vld [vmem:[%s5 + $0x8] sm:$0xff]
    %v384 = vld [vmem:[%s5 + $0x10] sm:$0xff]
    %v385 = vld [vmem:[%s5 + $0x18] sm:$0xff]
    %v387 = vsel %vm110, %v380, 0
    %v390 = vsel %vm110, %v381, 0
    %392 = vmatprep.subr.mxu0 0.0
    %393 = vmatpush1.msra.mxu0 %v382
    %394 = vmatprep.subr.mxu0 0.0
    %395 = vmatpush1.msra.mxu0 %v383
    %396 = vmatprep.subr.mxu0 0.0
    %397 = vmatpush1.msra.mxu0 %v384
    %398 = vmatprep.subr.mxu0 0.0
    %399 = vmatpush1.msra.mxu0 %v385
    %400 = vmatprep.subr.mxu0 0.0
    %401 = vmatpush1.msra.mxu0 0.0
    %402 = vmatprep.subr.mxu0 0.0
    %403 = vmatpush1.msra.mxu0 0.0
    %404 = vmatprep.subr.mxu0 0.0
    %405 = vmatpush1.msra.mxu0 0.0
    %406 = vmatprep.subr.mxu0 0.0
    %407 = vmatpush1.msra.mxu0 0.0
    %408 = vmatprep.subr.mxu0 0.0
    %409 = vmatpush1.msra.mxu0 0.0
    %410 = vmatprep.subr.mxu0 0.0
    %411 = vmatpush1.msra.mxu0 0.0
    %412 = vmatprep.subr.mxu0 0.0
    %413 = vmatpush1.msra.mxu0 0.0
    %414 = vmatprep.subr.mxu0 0.0
    %415 = vmatpush1.msra.mxu0 0.0
    %416 = vmatprep.subr.mxu0 0.0
    %417 = vmatpush1.msra.mxu0 0.0
    %418 = vmatprep.subr.mxu0 0.0
    %419 = vmatpush1.msra.mxu0 0.0
    %420 = vmatprep.subr.mxu0 0.0
    %421 = vmatpush1.msra.mxu0 0.0
    %422 = vmatprep.subr.mxu0 0.0
    %423 = vmatpush1.msra.mxu0 0.0
    %424 = vmatprep.subr.mxu0 0.0
    %425 = vmatpush1.msra.mxu0 0.0
    %426 = vmatprep.subr.mxu0 0.0
    %427 = vmatpush1.msra.mxu0 0.0
    %428 = vmatprep.subr.mxu0 0.0
    %429 = vmatpush1.msra.mxu0 0.0
    %430 = vmatprep.subr.mxu0 0.0
    %431 = vmatpush1.msra.mxu0 0.0
    %432 = vmatprep.subr.mxu0 0.0
    %433 = vmatpush1.msra.mxu0 0.0
    %434 = vmatprep.subr.mxu0 0.0
    %435 = vmatpush1.msra.mxu0 0.0
    %436 = vmatprep.subr.mxu0 0.0
    %437 = vmatpush1.msra.mxu0 0.0
    %438 = vmatprep.subr.mxu0 0.0
    %439 = vmatpush1.msra.mxu0 0.0
    %440 = vmatprep.subr.mxu0 0.0
    %441 = vmatpush1.msra.mxu0 0.0
    %442 = vmatprep.subr.mxu0 0.0
    %443 = vmatpush1.msra.mxu0 0.0
    %444 = vmatprep.subr.mxu0 0.0
    %445 = vmatpush1.msra.mxu0 0.0
    %446 = vmatprep.subr.mxu0 0.0
    %447 = vmatpush1.msra.mxu0 0.0
    %448 = vmatprep.subr.mxu0 0.0
    %449 = vmatpush1.msra.mxu0 0.0
    %450 = vmatprep.subr.mxu0 0.0
    %451 = vmatpush1.msra.mxu0 0.0
    %452 = vmatprep.subr.mxu0 0.0
    %453 = vmatpush1.msra.mxu0 0.0
    %454 = vmatprep.subr.mxu0 0.0
    %455 = vmatpush1.msra.mxu0 0.0
    %456 = vmatprep.mubr.f32.mxu0 0.0
    %457 = vmatmul.mubr.f32.gmra.mrb[0].mxu0 %v387
    %v458 = vpop.f32.mrb[0].mxu0
    %v459 = vadd.f32 0.0, %v458
    %v460 = vpop.f32.mrb[0].mxu0
    %461 = vmatprep.mubr.f32.mxu0 0.0
    %462 = vmatmul.mubr.f32.gmra.mrb[0].mxu0 %v390
    %v463 = vpop.f32.mrb[0].mxu0
    %v464 = vadd.f32 0.0, %v463
    %v465 = vpop.f32.mrb[0].mxu0
    %466 = vdwg.mxu0
    %v467 = vlaneseq
    %v468 = vshrl.u32 %v467, 7
    %v469 = vstv %s95
    %vm470 = vcmp.le.s32.totalorder %v468, %v469
    %v471 = vsel %vm470, 1, 0
    %vm472 = vcmp.eq.s32.totalorder %v471, 1
    %v473 = vsel %vm472, %v459, -1.7014117e+38
    %v474 = vsel %vm472, %v464, -1.7014117e+38
    %vm475 = vcmask 31744
    %v476 = vsel %vm475, %v473, -inf
    %v477 = vrot.slane %v476, 4
    %v478 = vmax.f32 %v476, %v477
    %v479 = vrot.slane %v478, 2
    %v480 = vmax.f32 %v478, %v479
    %v481 = vrot.slane %v480, 1
    %v482 = vmax.f32 %v480, %v481
    %v483 = vsel %vm475, %v474, -inf
    %v484 = vrot.slane %v483, 4
    %v485 = vmax.f32 %v483, %v484
    %v486 = vrot.slane %v485, 2
    %v487 = vmax.f32 %v485, %v486
    %v488 = vrot.slane %v487, 1
    %v489 = vmax.f32 %v487, %v488
    %v490 = vsub.f32 %v473, %v482
    %v491 = vsub.f32 %v474, %v489
    %v492 = vmul.f32 %v490, 1.442695
    %v493 = vpow.pop %v492
    %v494 = vmul.f32 %v491, 1.442695
    %v495 = vpow.pop %v494
    %v496 = vsel %vm475, %v493, 0.0
    %v497 = vrot.slane %v496, 4
    %v498 = vadd.f32 %v496, %v497
    %v499 = vrot.slane %v498, 2
    %v500 = vadd.f32 %v498, %v499
    %v501 = vrot.slane %v500, 1
    %v502 = vadd.f32 %v500, %v501
    %v503 = vsel %vm475, %v495, 0.0
    %v504 = vrot.slane %v503, 4
    %v505 = vadd.f32 %v503, %v504
    %v506 = vrot.slane %v505, 2
    %v507 = vadd.f32 %v505, %v506
    %v508 = vrot.slane %v507, 1
    %v509 = vadd.f32 %v507, %v508
    %v510 = vrcp.pop %v502
    %v511 = vrcp.pop %v509
    %v512 = vmul.f32 %v493, %v510
    %v513 = vmul.f32 %v495, %v511
    %v514 = vld [vmem:[#allocation7] sm:$0xf]
    %v516 = vsel %vm475, %v512, 0
    %v519 = vsel %vm475, %v513, 0
    %vm521 = vcmask 1043456
    %v523 = vsel %vm521, %v514, 0
    %525 = vmatprep.subr.mxu0 0.0
    %526 = vmatpush1.msra.mxu0 %v523
    %527 = vmatprep.subr.mxu0 0.0
    %528 = vmatpush1.msra.mxu0 0.0
    %529 = vmatprep.subr.mxu0 0.0
    %530 = vmatpush1.msra.mxu0 0.0
    %531 = vmatprep.subr.mxu0 0.0
    %532 = vmatpush1.msra.mxu0 0.0
    %533 = vmatprep.subr.mxu0 0.0
    %534 = vmatpush1.msra.mxu0 0.0
    %535 = vmatprep.subr.mxu0 0.0
    %536 = vmatpush1.msra.mxu0 0.0
    %537 = vmatprep.subr.mxu0 0.0
    %538 = vmatpush1.msra.mxu0 0.0
    %539 = vmatprep.subr.mxu0 0.0
    %540 = vmatpush1.msra.mxu0 0.0
    %541 = vmatprep.subr.mxu0 0.0
    %542 = vmatpush1.msra.mxu0 0.0
    %543 = vmatprep.subr.mxu0 0.0
    %544 = vmatpush1.msra.mxu0 0.0
    %545 = vmatprep.subr.mxu0 0.0
    %546 = vmatpush1.msra.mxu0 0.0
    %547 = vmatprep.subr.mxu0 0.0
    %548 = vmatpush1.msra.mxu0 0.0
    %549 = vmatprep.subr.mxu0 0.0
    %550 = vmatpush1.msra.mxu0 0.0
    %551 = vmatprep.subr.mxu0 0.0
    %552 = vmatpush1.msra.mxu0 0.0
    %553 = vmatprep.subr.mxu0 0.0
    %554 = vmatpush1.msra.mxu0 0.0
    %555 = vmatprep.subr.mxu0 0.0
    %556 = vmatpush1.msra.mxu0 0.0
    %557 = vmatprep.subr.mxu0 0.0
    %558 = vmatpush1.msra.mxu0 0.0
    %559 = vmatprep.subr.mxu0 0.0
    %560 = vmatpush1.msra.mxu0 0.0
    %561 = vmatprep.subr.mxu0 0.0
    %562 = vmatpush1.msra.mxu0 0.0
    %563 = vmatprep.subr.mxu0 0.0
    %564 = vmatpush1.msra.mxu0 0.0
    %565 = vmatprep.subr.mxu0 0.0
    %566 = vmatpush1.msra.mxu0 0.0
    %567 = vmatprep.subr.mxu0 0.0
    %568 = vmatpush1.msra.mxu0 0.0
    %569 = vmatprep.subr.mxu0 0.0
    %570 = vmatpush1.msra.mxu0 0.0
    %571 = vmatprep.subr.mxu0 0.0
    %572 = vmatpush1.msra.mxu0 0.0
    %573 = vmatprep.subr.mxu0 0.0
    %574 = vmatpush1.msra.mxu0 0.0
    %575 = vmatprep.subr.mxu0 0.0
    %576 = vmatpush1.msra.mxu0 0.0
    %577 = vmatprep.subr.mxu0 0.0
    %578 = vmatpush1.msra.mxu0 0.0
    %579 = vmatprep.subr.mxu0 0.0
    %580 = vmatpush1.msra.mxu0 0.0
    %581 = vmatprep.subr.mxu0 0.0
    %582 = vmatpush1.msra.mxu0 0.0
    %583 = vmatprep.subr.mxu0 0.0
    %584 = vmatpush1.msra.mxu0 0.0
    %585 = vmatprep.subr.mxu0 0.0
    %586 = vmatpush1.msra.mxu0 0.0
    %587 = vmatprep.subr.mxu0 0.0
    %588 = vmatpush1.msra.mxu0 0.0
    %589 = vmatprep.mubr.f32.mxu0 0.0
    %590 = vmatmul.mubr.f32.gmra.mrb[0].mxu0 %v516
    %v591 = vpop.f32.mrb[0].mxu0
    %v592 = vadd.f32 0.0, %v591
    %v593 = vpop.f32.mrb[0].mxu0
    %594 = vmatprep.mubr.f32.mxu0 0.0
    %595 = vmatmul.mubr.f32.gmra.mrb[0].mxu0 %v519
    %v596 = vpop.f32.mrb[0].mxu0
    %v597 = vadd.f32 0.0, %v596
    %v598 = vpop.f32.mrb[0].mxu0
    %599 = vdwg.mxu0
    %v600 = vmul.f32 %v592, %v339
    %v601 = vmul.f32 %v597, %v344
    %v602 = vsel %vm110, %v600, 0.0
    %v603 = vrot.slane %v602, 4
    %v604 = vadd.f32 %v602, %v603
    %v605 = vrot.slane %v604, 2
    %v606 = vadd.f32 %v604, %v605
    %v607 = vrot.slane %v606, 1
    %v608 = vadd.f32 %v606, %v607
    %v609 = vsel %vm110, %v601, 0.0
    %v610 = vrot.slane %v609, 4
    %v611 = vadd.f32 %v609, %v610
    %v612 = vrot.slane %v611, 2
    %v613 = vadd.f32 %v611, %v612
    %v614 = vrot.slane %v613, 1
    %v615 = vadd.f32 %v613, %v614
    %v616 = vld [vmem:[#allocation9] sm:$0xff]
    %v617 = vld [vmem:[#allocation9 + $0x8] sm:$0xff]
    %v618 = vld [vmem:[#allocation9 + $0x10] sm:$0xff]
    %v619 = vld [vmem:[#allocation9 + $0x18] sm:$0xff]
    %v620 = vld [vmem:[%s8] sm:$0x1]
    %v622 = vlaneseq
    %v623 = vshrl.u32 %v622, 7
    %v624 = vsub.s32 0, %v623
    %v625 = vrot.slane %v620, %v624
    %v629 = vsel %vm108, %v615, %v608
    %v630 = vsel %vm110, %v629, 0
    %632 = vmatprep.subr.mxu0 0.0
    %633 = vmatpush1.msra.mxu0 %v616
    %634 = vmatprep.subr.mxu0 0.0
    %635 = vmatpush1.msra.mxu0 %v617
    %636 = vmatprep.subr.mxu0 0.0
    %637 = vmatpush1.msra.mxu0 %v618
    %638 = vmatprep.subr.mxu0 0.0
    %639 = vmatpush1.msra.mxu0 %v619
    %640 = vmatprep.subr.mxu0 0.0
    %641 = vmatpush1.msra.mxu0 0.0
    %642 = vmatprep.subr.mxu0 0.0
    %643 = vmatpush1.msra.mxu0 0.0
    %644 = vmatprep.subr.mxu0 0.0
    %645 = vmatpush1.msra.mxu0 0.0
    %646 = vmatprep.subr.mxu0 0.0
    %647 = vmatpush1.msra.mxu0 0.0
    %648 = vmatprep.subr.mxu0 0.0
    %649 = vmatpush1.msra.mxu0 0.0
    %650 = vmatprep.subr.mxu0 0.0
    %651 = vmatpush1.msra.mxu0 0.0
    %652 = vmatprep.subr.mxu0 0.0
    %653 = vmatpush1.msra.mxu0 0.0
    %654 = vmatprep.subr.mxu0 0.0
    %655 = vmatpush1.msra.mxu0 0.0
    %656 = vmatprep.subr.mxu0 0.0
    %657 = vmatpush1.msra.mxu0 0.0
    %658 = vmatprep.subr.mxu0 0.0
    %659 = vmatpush1.msra.mxu0 0.0
    %660 = vmatprep.subr.mxu0 0.0
    %661 = vmatpush1.msra.mxu0 0.0
    %662 = vmatprep.subr.mxu0 0.0
    %663 = vmatpush1.msra.mxu0 0.0
    %664 = vmatprep.subr.mxu0 0.0
    %665 = vmatpush1.msra.mxu0 0.0
    %666 = vmatprep.subr.mxu0 0.0
    %667 = vmatpush1.msra.mxu0 0.0
    %668 = vmatprep.subr.mxu0 0.0
    %669 = vmatpush1.msra.mxu0 0.0
    %670 = vmatprep.subr.mxu0 0.0
    %671 = vmatpush1.msra.mxu0 0.0
    %672 = vmatprep.subr.mxu0 0.0
    %673 = vmatpush1.msra.mxu0 0.0
    %674 = vmatprep.subr.mxu0 0.0
    %675 = vmatpush1.msra.mxu0 0.0
    %676 = vmatprep.subr.mxu0 0.0
    %677 = vmatpush1.msra.mxu0 0.0
    %678 = vmatprep.subr.mxu0 0.0
    %679 = vmatpush1.msra.mxu0 0.0
    %680 = vmatprep.subr.mxu0 0.0
    %681 = vmatpush1.msra.mxu0 0.0
    %682 = vmatprep.subr.mxu0 0.0
    %683 = vmatpush1.msra.mxu0 0.0
    %684 = vmatprep.subr.mxu0 0.0
    %685 = vmatpush1.msra.mxu0 0.0
    %686 = vmatprep.subr.mxu0 0.0
    %687 = vmatpush1.msra.mxu0 0.0
    %688 = vmatprep.subr.mxu0 0.0
    %689 = vmatpush1.msra.mxu0 0.0
    %690 = vmatprep.subr.mxu0 0.0
    %691 = vmatpush1.msra.mxu0 0.0
    %692 = vmatprep.subr.mxu0 0.0
    %693 = vmatpush1.msra.mxu0 0.0
    %694 = vmatprep.subr.mxu0 0.0
    %695 = vmatpush1.msra.mxu0 0.0
    %696 = vmatprep.mubr.f32.mxu0 0.0
    %697 = vmatmul.mubr.f32.gmra.mrb[0].mxu0 %v630
    %v698 = vpop.f32.mrb[0].mxu0
    %v699 = vadd.f32 %v625, %v698
    %v700 = vpop.f32.mrb[0].mxu0
    %701 = vdwg.mxu0
    %vm702 = vcmask 254976
    %v703 = vsel %vm702, %v699, 0.0
    %704 = vadd.xlane.f32.xlu0 %v703
    %v705 = vpop.xlane.xlu0 %704
    %v706 = vrcp.pop 32.0
    %v707 = vmul.f32 %v705, %v706
    %v708 = vsub.f32 %v699, %v707
    %v709 = vmul.f32 %v708, %v708
    %v710 = vsel %vm702, %v709, 0.0
    %711 = vadd.xlane.f32.xlu0 %v710
    %v712 = vpop.xlane.xlu0 %711
    %v713 = vmul.f32 %v712, %v706
    %v714 = vadd.f32 %v713, 1e-05
    %v715 = vrsqrt.pop %v714
    %v716 = vmul.f32 %v708, %v715
    %v717 = vld [vmem:[%s9] sm:$0x1]
    %v719 = vlaneseq
    %v720 = vshrl.u32 %v719, 7
    %v721 = vsub.s32 0, %v720
    %v722 = vrot.slane %v717, %v721
    %v724 = vmul.f32 %v716, %v722
    %v725 = vld [vmem:[%s10] sm:$0x1]
    %v727 = vlaneseq
    %v728 = vshrl.u32 %v727, 7
    %v729 = vsub.s32 0, %v728
    %v730 = vrot.slane %v725, %v729
    %v732 = vadd.f32 %v724, %v730
    %v733 = vld [vmem:[%s11] sm:$0xff]
    %v734 = vld [vmem:[%s11 + $0x8] sm:$0xff]
    %v735 = vld [vmem:[%s11 + $0x10] sm:$0xff]
    %v736 = vld [vmem:[%s11 + $0x18] sm:$0xff]
    %v737 = vld [vmem:[%s12] sm:$0x1]
    %v739 = vlaneseq
    %v740 = vshrl.u32 %v739, 7
    %v741 = vsub.s32 0, %v740
    %v742 = vrot.slane %v737, %v741
    %v745 = vsel %vm110, %v732, 0
    %747 = vmatprep.subr.mxu0 0.0
    %748 = vmatpush1.msra.mxu0 %v733
    %749 = vmatprep.subr.mxu0 0.0
    %750 = vmatpush1.msra.mxu0 %v734
    %751 = vmatprep.subr.mxu0 0.0
    %752 = vmatpush1.msra.mxu0 %v735
    %753 = vmatprep.subr.mxu0 0.0
    %754 = vmatpush1.msra.mxu0 %v736
    %755 = vmatprep.subr.mxu0 0.0
    %756 = vmatpush1.msra.mxu0 0.0
    %757 = vmatprep.subr.mxu0 0.0
    %758 = vmatpush1.msra.mxu0 0.0
    %759 = vmatprep.subr.mxu0 0.0
    %760 = vmatpush1.msra.mxu0 0.0
    %761 = vmatprep.subr.mxu0 0.0
    %762 = vmatpush1.msra.mxu0 0.0
    %763 = vmatprep.subr.mxu0 0.0
    %764 = vmatpush1.msra.mxu0 0.0
    %765 = vmatprep.subr.mxu0 0.0
    %766 = vmatpush1.msra.mxu0 0.0
    %767 = vmatprep.subr.mxu0 0.0
    %768 = vmatpush1.msra.mxu0 0.0
    %769 = vmatprep.subr.mxu0 0.0
    %770 = vmatpush1.msra.mxu0 0.0
    %771 = vmatprep.subr.mxu0 0.0
    %772 = vmatpush1.msra.mxu0 0.0
    %773 = vmatprep.subr.mxu0 0.0
    %774 = vmatpush1.msra.mxu0 0.0
    %775 = vmatprep.subr.mxu0 0.0
    %776 = vmatpush1.msra.mxu0 0.0
    %777 = vmatprep.subr.mxu0 0.0
    %778 = vmatpush1.msra.mxu0 0.0
    %779 = vmatprep.subr.mxu0 0.0
    %780 = vmatpush1.msra.mxu0 0.0
    %781 = vmatprep.subr.mxu0 0.0
    %782 = vmatpush1.msra.mxu0 0.0
    %783 = vmatprep.subr.mxu0 0.0
    %784 = vmatpush1.msra.mxu0 0.0
    %785 = vmatprep.subr.mxu0 0.0
    %786 = vmatpush1.msra.mxu0 0.0
    %787 = vmatprep.subr.mxu0 0.0
    %788 = vmatpush1.msra.mxu0 0.0
    %789 = vmatprep.subr.mxu0 0.0
    %790 = vmatpush1.msra.mxu0 0.0
    %791 = vmatprep.subr.mxu0 0.0
    %792 = vmatpush1.msra.mxu0 0.0
    %793 = vmatprep.subr.mxu0 0.0
    %794 = vmatpush1.msra.mxu0 0.0
    %795 = vmatprep.subr.mxu0 0.0
    %796 = vmatpush1.msra.mxu0 0.0
    %797 = vmatprep.subr.mxu0 0.0
    %798 = vmatpush1.msra.mxu0 0.0
    %799 = vmatprep.subr.mxu0 0.0
    %800 = vmatpush1.msra.mxu0 0.0
    %801 = vmatprep.subr.mxu0 0.0
    %802 = vmatpush1.msra.mxu0 0.0
    %803 = vmatprep.subr.mxu0 0.0
    %804 = vmatpush1.msra.mxu0 0.0
    %805 = vmatprep.subr.mxu0 0.0
    %806 = vmatpush1.msra.mxu0 0.0
    %807 = vmatprep.subr.mxu0 0.0
    %808 = vmatpush1.msra.mxu0 0.0
    %809 = vmatprep.subr.mxu0 0.0
    %810 = vmatpush1.msra.mxu0 0.0
    %811 = vmatprep.mubr.f32.mxu0 0.0
    %812 = vmatmul.mubr.f32.gmra.mrb[0].mxu0 %v745
    %v813 = vpop.f32.mrb[0].mxu0
    %v814 = vadd.f32 %v742, %v813
    %v815 = vpop.f32.mrb[0].mxu0
    %816 = vdwg.mxu0
    %v817 = vmax.f32 %v814, 0.0
    %v818 = vld [vmem:[%s13] sm:$0xff]
    %v819 = vld [vmem:[%s13 + $0x8] sm:$0xff]
    %v820 = vld [vmem:[%s13 + $0x10] sm:$0xff]
    %v821 = vld [vmem:[%s13 + $0x18] sm:$0xff]
    %v822 = vld [vmem:[%s13 + $0x20] sm:$0xff]
    %v823 = vld [vmem:[%s13 + $0x28] sm:$0xff]
    %v824 = vld [vmem:[%s13 + $0x30] sm:$0xff]
    %v825 = vld [vmem:[%s13 + $0x38] sm:$0xff]
    %v826 = vld [vmem:[%s14] sm:$0x1]
    %v828 = vlaneseq
    %v829 = vshrl.u32 %v828, 7
    %v830 = vsub.s32 0, %v829
    %v831 = vrot.slane %v826, %v830
    %vm833 = vcmask 523264
    %v835 = vsel %vm833, %v817, 0
    %837 = vmatprep.subr.mxu0 0.0
    %838 = vmatpush1.msra.mxu0 %v818
    %839 = vmatprep.subr.mxu0 0.0
    %840 = vmatpush1.msra.mxu0 %v819
    %841 = vmatprep.subr.mxu0 0.0
    %842 = vmatpush1.msra.mxu0 %v820
    %843 = vmatprep.subr.mxu0 0.0
    %844 = vmatpush1.msra.mxu0 %v821
    %845 = vmatprep.subr.mxu0 0.0
    %846 = vmatpush1.msra.mxu0 %v822
    %847 = vmatprep.subr.mxu0 0.0
    %848 = vmatpush1.msra.mxu0 %v823
    %849 = vmatprep.subr.mxu0 0.0
    %850 = vmatpush1.msra.mxu0 %v824
    %851 = vmatprep.subr.mxu0 0.0
    %852 = vmatpush1.msra.mxu0 %v825
    %853 = vmatprep.subr.mxu0 0.0
    %854 = vmatpush1.msra.mxu0 0.0
    %855 = vmatprep.subr.mxu0 0.0
    %856 = vmatpush1.msra.mxu0 0.0
    %857 = vmatprep.subr.mxu0 0.0
    %858 = vmatpush1.msra.mxu0 0.0
    %859 = vmatprep.subr.mxu0 0.0
    %860 = vmatpush1.msra.mxu0 0.0
    %861 = vmatprep.subr.mxu0 0.0
    %862 = vmatpush1.msra.mxu0 0.0
    %863 = vmatprep.subr.mxu0 0.0
    %864 = vmatpush1.msra.mxu0 0.0
    %865 = vmatprep.subr.mxu0 0.0
    %866 = vmatpush1.msra.mxu0 0.0
    %867 = vmatprep.subr.mxu0 0.0
    %868 = vmatpush1.msra.mxu0 0.0
    %869 = vmatprep.subr.mxu0 0.0
    %870 = vmatpush1.msra.mxu0 0.0
    %871 = vmatprep.subr.mxu0 0.0
    %872 = vmatpush1.msra.mxu0 0.0
    %873 = vmatprep.subr.mxu0 0.0
    %874 = vmatpush1.msra.mxu0 0.0
    %875 = vmatprep.subr.mxu0 0.0
    %876 = vmatpush1.msra.mxu0 0.0
    %877 = vmatprep.subr.mxu0 0.0
    %878 = vmatpush1.msra.mxu0 0.0
    %879 = vmatprep.subr.mxu0 0.0
    %880 = vmatpush1.msra.mxu0 0.0
    %881 = vmatprep.subr.mxu0 0.0
    %882 = vmatpush1.msra.mxu0 0.0
    %883 = vmatprep.subr.mxu0 0.0
    %884 = vmatpush1.msra.mxu0 0.0
    %885 = vmatprep.subr.mxu0 0.0
    %886 = vmatpush1.msra.mxu0 0.0
    %887 = vmatprep.subr.mxu0 0.0
    %888 = vmatpush1.msra.mxu0 0.0
    %889 = vmatprep.subr.mxu0 0.0
    %890 = vmatpush1.msra.mxu0 0.0
    %891 = vmatprep.subr.mxu0 0.0
    %892 = vmatpush1.msra.mxu0 0.0
    %893 = vmatprep.subr.mxu0 0.0
    %894 = vmatpush1.msra.mxu0 0.0
    %895 = vmatprep.subr.mxu0 0.0
    %896 = vmatpush1.msra.mxu0 0.0
    %897 = vmatprep.subr.mxu0 0.0
    %898 = vmatpush1.msra.mxu0 0.0
    %899 = vmatprep.subr.mxu0 0.0
    %900 = vmatpush1.msra.mxu0 0.0
    %901 = vmatprep.mubr.f32.mxu0 0.0
    %902 = vmatmul.mubr.f32.gmra.mrb[0].mxu0 %v835
    %v903 = vpop.f32.mrb[0].mxu0
    %v904 = vadd.f32 %v831, %v903
    %v905 = vpop.f32.mrb[0].mxu0
    %906 = vdwg.mxu0
    %v907 = vsel %vm702, %v904, 0.0
    %908 = vadd.xlane.f32.xlu0 %v907
    %v909 = vpop.xlane.xlu0 %908
    %v910 = vmul.f32 %v909, %v706
    %v911 = vsub.f32 %v904, %v910
    %v912 = vmul.f32 %v911, %v911
    %v913 = vsel %vm702, %v912, 0.0
    %914 = vadd.xlane.f32.xlu0 %v913
    %v915 = vpop.xlane.xlu0 %914
    %v916 = vmul.f32 %v915, %v706
    %v917 = vadd.f32 %v916, 1e-05
    %v918 = vrsqrt.pop %v917
    %v919 = vmul.f32 %v911, %v918
    %v920 = vld [vmem:[%s15] sm:$0x1]
    %v922 = vlaneseq
    %v923 = vshrl.u32 %v922, 7
    %v924 = vsub.s32 0, %v923
    %v925 = vrot.slane %v920, %v924
    %v927 = vmul.f32 %v919, %v925
    %v928 = vld [vmem:[%s16] sm:$0x1]
    %v930 = vlaneseq
    %v931 = vshrl.u32 %v930, 7
    %v932 = vsub.s32 0, %v931
    %v933 = vrot.slane %v928, %v932
    %v935 = vadd.f32 %v927, %v933
    %936 = vst.msk [vmem:[#allocation10] sm:$0x3] %vm702, %v935
    // Predicated region
    $region78: #{tpu_custom_call.1} parent=1 // pred_check
      _
    $region79: #{tpu_custom_call.1} parent=1 // pred_check_branch
      %938 = sbr.rel (0) target = $region81
    $region80: #{tpu_custom_call.1} parent=1 // pred_region
      %s940 = ssub.s32 32, 32
      %941 = vsyncadd [#allocation6], %s940
      %s943 = sshll.u32 [#allocation10], 4
      %s944 = int_to_ptr.vmem [resolvable:$true] %s943
      %946 = dma.vmem_to_hbm [thread:$0]  %s944, 32, %s17, [#allocation6]
    $region81: #{tpu_custom_call.1} parent=1 // pred_fallthru
      _
    // Predicated region
    $region82: #{tpu_custom_call.1} parent=1 // pred_check
      _
    $region83: #{tpu_custom_call.1} parent=1 // pred_check_branch
      %948 = sbr.rel (0) target = $region85
    $region84: #{tpu_custom_call.1} parent=1 // pred_region
      %949 = dma.done [#allocation6], 32
    $region85: #{tpu_custom_call.1} parent=1 // pred_fallthru
      _
    %950 = vsyncpa [#allocation5], 1
    %951 = vsyncpa [#allocation8], 1
    %952 = vsyncpa [#allocation6], 1

</llo_original>
